<compile_context>
chip_gen: v6e
topology: v6e:2x2x1
jax: 0.10.0
libtpu: 0.0.40
codegen_flags: <defaults>
</compile_context>

<pallas_src>
from functools import partial

import jax
import jax.numpy as jnp
from jax.experimental import pallas as pl
from jax.experimental.pallas import tpu as pltpu


# ----------------------------- glue helpers ---------------------------------

def _to_regions(x, gr, gc):
    """NCHW -> (B, gr, gc, rh, rw, C)"""
    B, C, H, W = x.shape
    rh, rw = H // gr, W // gc
    x = x.reshape(B, C, gr, rh, gc, rw)
    return jnp.transpose(x, (0, 2, 4, 3, 5, 1))


def _from_regions(r, H, W):
    """(B, gr, gc, rh, rw, C) -> NCHW (used by the pure-JAX reference)"""
    B, gr, gc, rh, rw, C = r.shape
    r = jnp.transpose(r, (0, 5, 1, 3, 2, 4))  # (B, C, gr, rh, gc, rw)
    return r.reshape(B, C, gr * rh, gc * rw)


def _im2col_3x3(regions):
    """(B, gr, gc, rh, rw, C) -> (B, gr, gc, rh*rw, C*9).

    Patch channels are flattened in (c, kh, kw) order (c slowest), matching
    torch.nn.Conv2d weight.reshape(Cout, Cin*3*3), zero padding 1.
    """
    B, gr, gc, rh, rw, C = regions.shape
    padded = jnp.pad(regions, ((0, 0), (0, 0), (0, 0), (1, 1), (1, 1), (0, 0)))
    cols = []
    for kh in range(3):
        for kw in range(3):
            cols.append(padded[:, :, :, kh:kh + rh, kw:kw + rw, :])
    patches = jnp.stack(cols, axis=-2)                       # (..., rh, rw, 9, C)
    patches = jnp.transpose(patches, (0, 1, 2, 3, 4, 6, 5))  # (..., rh, rw, C, 9)
    return patches.reshape(B, gr, gc, rh * rw, C * 9)


# ------------------------------- kernel --------------------------------------

def _region_nonlocal_kernel(patches_ref, xtd_ref, xres_t_ref,
                            wsh_ref, bsh_ref, wg_ref, bg_ref, ww_ref, bw_ref,
                            out_ref, *, gr, gc, n_pix):
    R = gr * gc
    m_theta = R * n_pix
    ci = wsh_ref.shape[1]

    # Shared 3x3 conv as a SINGLE fused matmul over [theta rows ; phi rows].
    conv = jnp.dot(patches_ref[...], wsh_ref[...],
                   preferred_element_type=jnp.float32) + bsh_ref[...]
    theta = conv[:m_theta, :].reshape(gr, gc * n_pix, ci)   # (gr, gc*N, Ci)
    phi = conv[m_theta:, :].reshape(gr, n_pix, ci)          # (gr, N, Ci)

    # g: 1x1 conv on the diagonal x_t regions.
    gmat = (jnp.dot(xtd_ref[...], wg_ref[...],
                    preferred_element_type=jnp.float32) + bg_ref[...])
    gmat = gmat.reshape(gr, n_pix, ci)                      # (gr, N, Ci)

    # Non-local attention batched over grid rows; contraction on last dims
    # (no phi.T materialized).
    f = jnp.einsum('gkd,gmd->gkm', theta, phi,
                   preferred_element_type=jnp.float32)       # (gr, gc*N, N)
    f_max = jnp.max(f, axis=-1, keepdims=True)
    p = jnp.exp(f - f_max)
    denom = jnp.sum(p, axis=-1, keepdims=True)
    f_sm = p * pl.reciprocal(denom, approx=True)             # EUP, not VALU div
    y = jnp.einsum('gkm,gmd->gkd', f_sm, gmat,
                   preferred_element_type=jnp.float32)       # (gr, gc*N, Ci)

    # Final 1x1 conv computed directly channel-first -> lane-dense (C, R*N)
    # store; bias + residual added in the same layout.
    y2 = y.reshape(R * n_pix, ci)
    wy_t = jnp.einsum('cd,kd->ck', ww_ref[...], y2,
                      preferred_element_type=jnp.float32)    # (C, R*N)
    out_ref[...] = (wy_t + bw_ref[...] + xres_t_ref[...]).astype(out_ref.dtype)


# ------------------------------- wrapper --------------------------------------

@partial(jax.jit, static_argnames=("grid",))
def region_nonlocal_block(x, x_t, params, grid=(2, 2)):
    gr, gc = grid
    B, C, H, W = x.shape
    rh, rw = H // gr, W // gc
    N = rh * rw
    R = gr * gc
    C9 = C * 9
    Ci = params["wsh"].shape[1]

    xr = _to_regions(x, gr, gc)                    # (B, gr, gc, rh, rw, C)
    xtr = _to_regions(x_t, gr, gc)
    # diagonal x_t regions (i, i) -> reproduces the module's indexing quirk
    xtd = jnp.stack([xtr[:, i, i] for i in range(gr)], axis=1)  # (B, gr, rh, rw, C)

    # host-side im2col (XLA glue); fuse theta rows and phi rows on the M axis.
    px = _im2col_3x3(xr).reshape(B, R * N, C9)
    pxt = _im2col_3x3(xtd[:, :, None]).reshape(B, gr * N, C9)
    patches = jnp.concatenate([px, pxt], axis=1)   # (B, (R+gr)*N, 9C)

    xtd_flat = xtd.reshape(B, gr * N, C)           # g input (channel-last)
    # residual in channel-first, lane-dense layout (C, R*N)
    xres_t = jnp.transpose(xr, (0, 5, 1, 2, 3, 4)).reshape(B, C, R * N)

    rows = (R + gr) * N
    kern = partial(_region_nonlocal_kernel, gr=gr, gc=gc, n_pix=N)

    out = pl.pallas_call(
        kern,
        out_shape=jax.ShapeDtypeStruct((B, C, R * N), x.dtype),
        grid=(B,),
        in_specs=[
            pl.BlockSpec((None, rows, C9), lambda b: (b, 0, 0)),     # patches
            pl.BlockSpec((None, gr * N, C), lambda b: (b, 0, 0)),    # x_t diag
            pl.BlockSpec((None, C, R * N), lambda b: (b, 0, 0)),     # residual
            pl.BlockSpec((C9, Ci), lambda b: (0, 0)),                # wsh
            pl.BlockSpec((1, Ci), lambda b: (0, 0)),                 # bsh
            pl.BlockSpec((C, Ci), lambda b: (0, 0)),                 # wg
            pl.BlockSpec((1, Ci), lambda b: (0, 0)),                 # bg
            pl.BlockSpec((C, Ci), lambda b: (0, 0)),                 # ww
            pl.BlockSpec((C, 1), lambda b: (0, 0)),                  # bw
        ],
        out_specs=pl.BlockSpec((None, C, R * N), lambda b: (b, 0, 0)),
        compiler_params=pltpu.CompilerParams(
            dimension_semantics=("parallel",)),    # v7x: one batch per TC
    )(patches, xtd_flat, xres_t,
      params["wsh"], params["bsh"], params["wg"], params["bg"],
      params["ww"], params["bw"])

    # (B, C, R*N) -> NCHW
    out = out.reshape(B, C, gr, gc, rh, rw)
    return jnp.transpose(out, (0, 1, 2, 4, 3, 5)).reshape(B, C, H, W)


# ----------------------------- parameters -------------------------------------

def init_params(key, C):
    Ci = C // 2 if C // 2 > 0 else 1
    ks = jax.random.split(key, 6)
    # PyTorch conv weight layouts, converted to the kernel layouts.
    g_w = 0.2 * jax.random.normal(ks[0], (Ci, C, 1, 1), jnp.float32)
    g_b = 0.2 * jax.random.normal(ks[1], (Ci,), jnp.float32)
    sh_w = 0.2 * jax.random.normal(ks[2], (Ci, C, 3, 3), jnp.float32)
    sh_b = 0.2 * jax.random.normal(ks[3], (Ci,), jnp.float32)
    # NOTE: the PyTorch module zero-inits W.weight / W.bias (z == x). We use
    # nonzero values so the non-local path is actually exercised.
    W_w = 0.2 * jax.random.normal(ks[4], (C, Ci, 1, 1), jnp.float32)
    W_b = 0.2 * jax.random.normal(ks[5], (C,), jnp.float32)
    return dict(
        wg=g_w.reshape(Ci, C).T,          # (C, Ci)
        bg=g_b.reshape(1, Ci),
        wsh=sh_w.reshape(Ci, C * 9).T,    # (9C, Ci)
        bsh=sh_b.reshape(1, Ci),
        ww=W_w.reshape(C, Ci),            # (C, Ci)  torch layout, out = W @ y
        bw=W_b.reshape(C, 1),             # (C, 1)
    )


# ----------------------------- pure-JAX reference ------------------------------

def ref_forward(x, x_t, params, grid):
    gr, gc = grid
    B, C, H, W = x.shape
    rh, rw = H // gr, W // gc
    N = rh * rw
    xr = _to_regions(x, gr, gc)
    xtr = _to_regions(x_t, gr, gc)
    px = _im2col_3x3(xr)
    pxt = _im2col_3x3(xtr)
    xf = xr.reshape(B, gr, gc, N, C)
    xtf = xtr.reshape(B, gr, gc, N, C)
    out = jnp.zeros((B, gr, gc, N, C), x.dtype)
    for b in range(B):
        for i in range(gr):
            for j in range(gc):
                theta = px[b, i, j] @ params["wsh"] + params["bsh"]
                phi = pxt[b, i, i] @ params["wsh"] + params["bsh"]
                g = xtf[b, i, i] @ params["wg"] + params["bg"]
                f = jax.nn.softmax(theta @ phi.T, axis=-1)
                y = f @ g
                wy = y @ params["ww"].T + params["bw"].T
                out = out.at[b, i, j].set(wy + xf[b, i, j])
    return _from_regions(out.reshape(B, gr, gc, rh, rw, C), H, W)


# --------------------------------- main ----------------------------------------

if __name__ == "__main__":
    key = jax.random.PRNGKey(0)
    kx, kxt, kp = jax.random.split(key, 3)
    B, C, H, W = 2, 4, 16, 16          # in_channels=4 -> inter_channels=2
    grid = (2, 2)

    x = jax.random.normal(kx, (B, C, H, W), jnp.float32)
    x_t = jax.random.normal(kxt, (B, C, H, W), jnp.float32)
    params = init_params(kp, C)

    out = region_nonlocal_block(x, x_t, params, grid=grid)
    out = jax.block_until_ready(out)
    assert out.shape == (B, C, H, W)

    ref = ref_forward(x, x_t, params, grid)
    # slightly relaxed tolerance: approx (EUP) reciprocal in the softmax denom
    max_err = float(jnp.max(jnp.abs(out - ref)))
    assert max_err < 2e-2, f"max abs err {max_err}"

    print("KERNEL_OK")
</pallas_src>

<mosaic_0001>
module attributes {stable_mosaic.version = 11 : i64} {
  func.func @_region_nonlocal_kernel(%arg0: i32, %arg1: memref<1x384x36xf32, #tpu.memory_space<vmem>>, %arg2: memref<1x128x4xf32, #tpu.memory_space<vmem>>, %arg3: memref<1x4x256xf32, #tpu.memory_space<vmem>>, %arg4: memref<36x2xf32, #tpu.memory_space<vmem>>, %arg5: memref<1x2xf32, #tpu.memory_space<vmem>>, %arg6: memref<4x2xf32, #tpu.memory_space<vmem>>, %arg7: memref<1x2xf32, #tpu.memory_space<vmem>>, %arg8: memref<4x2xf32, #tpu.memory_space<vmem>>, %arg9: memref<4x1xf32, #tpu.memory_space<vmem>>, %arg10: memref<1x4x256xf32, #tpu.memory_space<vmem>>) attributes {dimension_semantics = [#tpu.dimension_semantics<parallel>], iteration_bounds = array<i64: 2>, scalar_prefetch = 0 : i64, scratch_operands = 0 : i64, tpu.core_type = #tpu.core_type<tc>, window_params = [{transform_indices = @transform_0, window_bounds = array<i64: 1, 384, 36>}, {transform_indices = @transform_1, window_bounds = array<i64: 1, 128, 4>}, {transform_indices = @transform_2, window_bounds = array<i64: 1, 4, 256>}, {pipeline_mode = #tpu.pipeline_mode<synchronous>, transform_indices = @transform_3, window_bounds = array<i64: 36, 2>}, {pipeline_mode = #tpu.pipeline_mode<synchronous>, transform_indices = @transform_4, window_bounds = array<i64: 1, 2>}, {pipeline_mode = #tpu.pipeline_mode<synchronous>, transform_indices = @transform_5, window_bounds = array<i64: 4, 2>}, {pipeline_mode = #tpu.pipeline_mode<synchronous>, transform_indices = @transform_6, window_bounds = array<i64: 1, 2>}, {pipeline_mode = #tpu.pipeline_mode<synchronous>, transform_indices = @transform_7, window_bounds = array<i64: 4, 2>}, {pipeline_mode = #tpu.pipeline_mode<synchronous>, transform_indices = @transform_8, window_bounds = array<i64: 4, 1>}, {transform_indices = @transform_9, window_bounds = array<i64: 1, 4, 256>}]} {
    %c0 = arith.constant 0 : index
    %c0_0 = arith.constant 0 : index
    %c0_1 = arith.constant 0 : index
    %0 = vector.load %arg1[%c0, %c0_0, %c0_1] : memref<1x384x36xf32, #tpu.memory_space<vmem>>, vector<1x384x36xf32>
    %1 = vector.shape_cast %0 : vector<1x384x36xf32> to vector<384x36xf32>
    %c0_2 = arith.constant 0 : index
    %c0_3 = arith.constant 0 : index
    %2 = vector.load %arg4[%c0_2, %c0_3] : memref<36x2xf32, #tpu.memory_space<vmem>>, vector<36x2xf32>
    %cst = arith.constant dense<0.000000e+00> : vector<384x2xf32>
    %3 = tpu.matmul %1, %2, %cst {dimension_numbers = #tpu.dot_dimension_numbers<[1], [0], [0], [1], [0, 0, 1, 1], [], []>} : vector<384x36xf32>, vector<36x2xf32>, vector<384x2xf32> -> vector<384x2xf32>
    %c0_4 = arith.constant 0 : index
    %c0_5 = arith.constant 0 : index
    %4 = vector.load %arg5[%c0_4, %c0_5] : memref<1x2xf32, #tpu.memory_space<vmem>>, vector<1x2xf32>
    %5 = vector.broadcast %4 : vector<1x2xf32> to vector<384x2xf32>
    %6 = arith.addf %3, %5 : vector<384x2xf32>
    %7 = vector.extract_strided_slice %6 {offsets = [0, 0], sizes = [256, 2], strides = [1, 1]} : vector<384x2xf32> to vector<256x2xf32>
    %8 = vector.shape_cast %7 : vector<256x2xf32> to vector<2x128x2xf32>
    %9 = vector.extract_strided_slice %6 {offsets = [256, 0], sizes = [128, 2], strides = [1, 1]} : vector<384x2xf32> to vector<128x2xf32>
    %10 = vector.shape_cast %9 : vector<128x2xf32> to vector<2x64x2xf32>
    %c0_6 = arith.constant 0 : index
    %c0_7 = arith.constant 0 : index
    %c0_8 = arith.constant 0 : index
    %11 = vector.load %arg2[%c0_6, %c0_7, %c0_8] : memref<1x128x4xf32, #tpu.memory_space<vmem>>, vector<1x128x4xf32>
    %12 = vector.shape_cast %11 : vector<1x128x4xf32> to vector<128x4xf32>
    %c0_9 = arith.constant 0 : index
    %c0_10 = arith.constant 0 : index
    %13 = vector.load %arg6[%c0_9, %c0_10] : memref<4x2xf32, #tpu.memory_space<vmem>>, vector<4x2xf32>
    %cst_11 = arith.constant dense<0.000000e+00> : vector<128x2xf32>
    %14 = tpu.matmul %12, %13, %cst_11 {dimension_numbers = #tpu.dot_dimension_numbers<[1], [0], [0], [1], [0, 0, 1, 1], [], []>} : vector<128x4xf32>, vector<4x2xf32>, vector<128x2xf32> -> vector<128x2xf32>
    %c0_12 = arith.constant 0 : index
    %c0_13 = arith.constant 0 : index
    %15 = vector.load %arg7[%c0_12, %c0_13] : memref<1x2xf32, #tpu.memory_space<vmem>>, vector<1x2xf32>
    %16 = vector.broadcast %15 : vector<1x2xf32> to vector<128x2xf32>
    %17 = arith.addf %14, %16 : vector<128x2xf32>
    %18 = vector.shape_cast %17 : vector<128x2xf32> to vector<2x64x2xf32>
    "tpu.trace_start"() <{level = 10 : i32, message = "gkd,gmd->gkm"}> : () -> ()
    %cst_14 = arith.constant dense<0.000000e+00> : vector<2x128x64xf32>
    %19 = tpu.matmul %8, %10, %cst_14 {dimension_numbers = #tpu.dot_dimension_numbers<[2], [2], [1], [1], [0, 0, 0, 1, 1, 1], [0], [0]>} : vector<2x128x2xf32>, vector<2x64x2xf32>, vector<2x128x64xf32> -> vector<2x128x64xf32>
    "tpu.trace_stop"() : () -> ()
    %cst_15 = arith.constant dense<0xFF800000> : vector<2x128xf32>
    %20 = vector.multi_reduction <maximumf>, %19, %cst_15 [2] : vector<2x128x64xf32> to vector<2x128xf32>
    %21 = vector.shape_cast %20 : vector<2x128xf32> to vector<2x128x1xf32>
    %22 = vector.broadcast %21 : vector<2x128x1xf32> to vector<2x128x64xf32>
    %23 = arith.subf %19, %22 : vector<2x128x64xf32>
    %24 = math.exp %23 : vector<2x128x64xf32>
    %cst_16 = arith.constant dense<0.000000e+00> : vector<2x128xf32>
    %25 = vector.multi_reduction <add>, %24, %cst_16 [2] : vector<2x128x64xf32> to vector<2x128xf32>
    %26 = vector.shape_cast %25 : vector<2x128xf32> to vector<2x128x1xf32>
    %27 = tpu.reciprocal %26 {approx = true} : vector<2x128x1xf32> -> vector<2x128x1xf32>
    %28 = vector.broadcast %27 : vector<2x128x1xf32> to vector<2x128x64xf32>
    %29 = arith.mulf %24, %28 : vector<2x128x64xf32>
    "tpu.trace_start"() <{level = 10 : i32, message = "gkm,gmd->gkd"}> : () -> ()
    %cst_17 = arith.constant dense<0.000000e+00> : vector<2x128x2xf32>
    %30 = tpu.matmul %29, %18, %cst_17 {dimension_numbers = #tpu.dot_dimension_numbers<[2], [1], [1], [2], [0, 0, 0, 1, 1, 2], [0], [0]>} : vector<2x128x64xf32>, vector<2x64x2xf32>, vector<2x128x2xf32> -> vector<2x128x2xf32>
    "tpu.trace_stop"() : () -> ()
    %31 = vector.shape_cast %30 : vector<2x128x2xf32> to vector<256x2xf32>
    %c0_18 = arith.constant 0 : index
    %c0_19 = arith.constant 0 : index
    %32 = vector.load %arg8[%c0_18, %c0_19] : memref<4x2xf32, #tpu.memory_space<vmem>>, vector<4x2xf32>
    "tpu.trace_start"() <{level = 10 : i32, message = "cd,kd->ck"}> : () -> ()
    %cst_20 = arith.constant dense<0.000000e+00> : vector<4x256xf32>
    %33 = tpu.matmul %32, %31, %cst_20 {dimension_numbers = #tpu.dot_dimension_numbers<[1], [1], [0], [0], [0, 0, 1, 0], [], []>} : vector<4x2xf32>, vector<256x2xf32>, vector<4x256xf32> -> vector<4x256xf32>
    "tpu.trace_stop"() : () -> ()
    %c0_21 = arith.constant 0 : index
    %c0_22 = arith.constant 0 : index
    %34 = vector.load %arg9[%c0_21, %c0_22] : memref<4x1xf32, #tpu.memory_space<vmem>>, vector<4x1xf32>
    %35 = vector.broadcast %34 : vector<4x1xf32> to vector<4x256xf32>
    %36 = arith.addf %33, %35 : vector<4x256xf32>
    %c0_23 = arith.constant 0 : index
    %c0_24 = arith.constant 0 : index
    %c0_25 = arith.constant 0 : index
    %37 = vector.load %arg3[%c0_23, %c0_24, %c0_25] : memref<1x4x256xf32, #tpu.memory_space<vmem>>, vector<1x4x256xf32>
    %38 = vector.shape_cast %37 : vector<1x4x256xf32> to vector<4x256xf32>
    %39 = arith.addf %36, %38 : vector<4x256xf32>
    %c0_26 = arith.constant 0 : index
    %c0_27 = arith.constant 0 : index
    %c0_28 = arith.constant 0 : index
    %40 = vector.load %arg10[%c0_26, %c0_27, %c0_28] : memref<1x4x256xf32, #tpu.memory_space<vmem>>, vector<1x4x256xf32>
    %41 = vector.shape_cast %40 : vector<1x4x256xf32> to vector<4x256xf32>
    %42 = vector.shape_cast %39 : vector<4x256xf32> to vector<1x4x256xf32>
    tpu.vector_store %arg10[%c0_26, %c0_27, %c0_28], %42 {strides = array<i32>} : memref<1x4x256xf32, #tpu.memory_space<vmem>>, vector<1x4x256xf32>,
    return
  }
  func.func @transform_0(%arg0: i32) -> (i32, i32, i32) {
    %c0_i32 = arith.constant 0 : i32
    %c0_i32_0 = arith.constant 0 : i32
    %c0_i32_1 = arith.constant 0 : i32
    return %arg0, %c0_i32, %c0_i32_0 : i32, i32, i32
  }
  func.func @transform_1(%arg0: i32) -> (i32, i32, i32) {
    %c0_i32 = arith.constant 0 : i32
    %c0_i32_0 = arith.constant 0 : i32
    %c0_i32_1 = arith.constant 0 : i32
    return %arg0, %c0_i32, %c0_i32_0 : i32, i32, i32
  }
  func.func @transform_2(%arg0: i32) -> (i32, i32, i32) {
    %c0_i32 = arith.constant 0 : i32
    %c0_i32_0 = arith.constant 0 : i32
    %c0_i32_1 = arith.constant 0 : i32
    return %arg0, %c0_i32, %c0_i32_0 : i32, i32, i32
  }
  func.func @transform_3(%arg0: i32) -> (i32, i32) {
    %c0_i32 = arith.constant 0 : i32
    %c0_i32_0 = arith.constant 0 : i32
    %c0_i32_1 = arith.constant 0 : i32
    return %c0_i32, %c0_i32_0 : i32, i32
  }
  func.func @transform_4(%arg0: i32) -> (i32, i32) {
    %c0_i32 = arith.constant 0 : i32
    %c0_i32_0 = arith.constant 0 : i32
    %c0_i32_1 = arith.constant 0 : i32
    return %c0_i32, %c0_i32_0 : i32, i32
  }
  func.func @transform_5(%arg0: i32) -> (i32, i32) {
    %c0_i32 = arith.constant 0 : i32
    %c0_i32_0 = arith.constant 0 : i32
    %c0_i32_1 = arith.constant 0 : i32
    return %c0_i32, %c0_i32_0 : i32, i32
  }
  func.func @transform_6(%arg0: i32) -> (i32, i32) {
    %c0_i32 = arith.constant 0 : i32
    %c0_i32_0 = arith.constant 0 : i32
    %c0_i32_1 = arith.constant 0 : i32
    return %c0_i32, %c0_i32_0 : i32, i32
  }
  func.func @transform_7(%arg0: i32) -> (i32, i32) {
    %c0_i32 = arith.constant 0 : i32
    %c0_i32_0 = arith.constant 0 : i32
    %c0_i32_1 = arith.constant 0 : i32
    return %c0_i32, %c0_i32_0 : i32, i32
  }
  func.func @transform_8(%arg0: i32) -> (i32, i32) {
    %c0_i32 = arith.constant 0 : i32
    %c0_i32_0 = arith.constant 0 : i32
    %c0_i32_1 = arith.constant 0 : i32
    return %c0_i32, %c0_i32_0 : i32, i32
  }
  func.func @transform_9(%arg0: i32) -> (i32, i32, i32) {
    %c0_i32 = arith.constant 0 : i32
    %c0_i32_0 = arith.constant 0 : i32
    %c0_i32_1 = arith.constant 0 : i32
    return %arg0, %c0_i32, %c0_i32_0 : i32, i32, i32
  }
}

</mosaic_0001>

<llo_original>
// kernel: region_nonlocal_block.1
$region0: #{region_nonlocal_block.1}
  #allocation0 [shape = 'u32[]', space=smem, size = 0x4, offset = 0x4, fixed_abs, tag = 'smem constant byte address 0x4 - core index']
  #allocation1 [shape = 'u32[144,128]{1,0:T(1,128)}', space=vmem, size = 0x12000, scoped, tag = 'internal scratch']
  %s0 = inlined_call_operand.vmem [shape: f32[2,384,36], index: 0, kind: input, shape index: {}]
  %s1 = inlined_call_operand.vmem [shape: f32[2,128,4], index: 1, kind: input, shape index: {}]
  %s2 = inlined_call_operand.vmem [shape: f32[2,4,256], index: 2, kind: input, shape index: {}]
  %s3 = inlined_call_operand.vmem [shape: f32[36,2], index: 3, kind: input, shape index: {}]
  %s4 = inlined_call_operand.vmem [shape: f32[1,2], index: 4, kind: input, shape index: {}]
  %s5 = inlined_call_operand.vmem [shape: f32[4,2], index: 5, kind: input, shape index: {}]
  %s6 = inlined_call_operand.vmem [shape: f32[1,2], index: 6, kind: input, shape index: {}]
  %s7 = inlined_call_operand.vmem [shape: f32[4,2], index: 7, kind: input, shape index: {}]
  %s8 = inlined_call_operand.vmem [shape: f32[4,1], index: 8, kind: input, shape index: {}]
  %s9 = inlined_call_operand.vmem [shape: f32[2,4,256], index: 9, kind: output, shape index: {}]
  %s10 = sld [smem:[#allocation0]]
  $region69: #{region_nonlocal_block.1} parent=0
    _
  %s12 = ssub.s32 1, %s10
  %s13 = scalar_select 0, %s12, %s10
  loop: start=0, step=1, limit=4
  $region2: #{region_nonlocal_block.1} parent=0 // loop_pre_header
    _
  $region3: #{region_nonlocal_block.1} parent=0 // loop_header
    %s15 = sphi 0, %s19
    %p16 = scmp.ge.s32.totalorder %s15, 4
    %s25 = sphi 0, %s27
    %s28 = sphi 0, %s25
    %s29 = sphi 0, %s28
    %s45 = sphi 0, %s29
    %s51 = sphi 0, %s53
    %s54 = sphi 0, %s51
    %s55 = sphi 0, %s54
    %s71 = sphi 0, %s55
    %s77 = sphi 0, %s79
    %s80 = sphi 0, %s77
    %s81 = sphi 0, %s80
    %s97 = sphi 0, %s81
    %s101 = sphi 0, %s101
    %s103 = sphi 0, %s101
    %s104 = sphi 0, %s103
    %s118 = sphi 0, %s104
    %s122 = sphi 0, %s122
    %s124 = sphi 0, %s122
    %s125 = sphi 0, %s124
    %s139 = sphi 0, %s125
    %s143 = sphi 0, %s143
    %s145 = sphi 0, %s143
    %s146 = sphi 0, %s145
    %s160 = sphi 0, %s146
    %s164 = sphi 0, %s164
    %s166 = sphi 0, %s164
    %s167 = sphi 0, %s166
    %s181 = sphi 0, %s167
    %s185 = sphi 0, %s185
    %s187 = sphi 0, %s185
    %s188 = sphi 0, %s187
    %s202 = sphi 0, %s188
    %s206 = sphi 0, %s206
    %s208 = sphi 0, %s206
    %s209 = sphi 0, %s208
    %s223 = sphi 0, %s209
    %s229 = sphi 0, %s231
    %s232 = sphi 0, %s229
    %s233 = sphi 0, %s232
    %s249 = sphi 0, %s233
  $region4: #{region_nonlocal_block.1} parent=0 // loop_header_branch
    %18 = sbr.rel (%p16) target = $region8
  $region5: #{region_nonlocal_block.1} parent=0 // loop_body
    %s20 = ssub.s32 %s15, 1
    %s21 = ssub.s32 %s15, 2
    %s22 = sadd.s32 %s15, 1
    %s23 = ssub.s32 %s15, %s22
    %p24 = scmp.eq.s32.totalorder %s23, 0
    %s26 = sadd.s32 %s25, 1
    %s27 = scalar_select %p24, %s25, %s26
    %p30 = pneg %p24
    %p31 = scmp.eq.s32.totalorder %s15, 1
    %p32 = por %p30, %p31
    %p33 = scmp.ne.s32.totalorder %s25, %s28
    %p34 = scmp.eq.s32.totalorder %s15, 0
    %p35 = por %p33, %p34
    %p36 = scmp.ne.s32.totalorder %s25, %s28
    %p37 = scmp.eq.s32.totalorder %s20, 1
    %p38 = por %p36, %p37
    %p39 = scmp.ne.s32.totalorder %s28, %s29
    %p40 = scmp.eq.s32.totalorder %s20, 0
    %p41 = por %p39, %p40
    %p42 = scmp.ne.s32.totalorder %s28, %s29
    %p43 = scmp.eq.s32.totalorder %s21, 1
    %p44 = por %p42, %p43
    %p46 = scmp.ne.s32.totalorder %s29, %s45
    %p47 = scmp.eq.s32.totalorder %s21, 0
    %p48 = por %p46, %p47
    %s49 = ssub.s32 %s15, %s22
    %p50 = scmp.eq.s32.totalorder %s49, 0
    %s52 = sadd.s32 %s51, 1
    %s53 = scalar_select %p50, %s51, %s52
    %p56 = pneg %p50
    %p57 = scmp.eq.s32.totalorder %s15, 1
    %p58 = por %p56, %p57
    %p59 = scmp.ne.s32.totalorder %s51, %s54
    %p60 = scmp.eq.s32.totalorder %s15, 0
    %p61 = por %p59, %p60
    %p62 = scmp.ne.s32.totalorder %s51, %s54
    %p63 = scmp.eq.s32.totalorder %s20, 1
    %p64 = por %p62, %p63
    %p65 = scmp.ne.s32.totalorder %s54, %s55
    %p66 = scmp.eq.s32.totalorder %s20, 0
    %p67 = por %p65, %p66
    %p68 = scmp.ne.s32.totalorder %s54, %s55
    %p69 = scmp.eq.s32.totalorder %s21, 1
    %p70 = por %p68, %p69
    %p72 = scmp.ne.s32.totalorder %s55, %s71
    %p73 = scmp.eq.s32.totalorder %s21, 0
    %p74 = por %p72, %p73
    %s75 = ssub.s32 %s15, %s22
    %p76 = scmp.eq.s32.totalorder %s75, 0
    %s78 = sadd.s32 %s77, 1
    %s79 = scalar_select %p76, %s77, %s78
    %p82 = pneg %p76
    %p83 = scmp.eq.s32.totalorder %s15, 1
    %p84 = por %p82, %p83
    %p85 = scmp.ne.s32.totalorder %s77, %s80
    %p86 = scmp.eq.s32.totalorder %s15, 0
    %p87 = por %p85, %p86
    %p88 = scmp.ne.s32.totalorder %s77, %s80
    %p89 = scmp.eq.s32.totalorder %s20, 1
    %p90 = por %p88, %p89
    %p91 = scmp.ne.s32.totalorder %s80, %s81
    %p92 = scmp.eq.s32.totalorder %s20, 0
    %p93 = por %p91, %p92
    %p94 = scmp.ne.s32.totalorder %s80, %s81
    %p95 = scmp.eq.s32.totalorder %s21, 1
    %p96 = por %p94, %p95
    %p98 = scmp.ne.s32.totalorder %s81, %s97
    %p99 = scmp.eq.s32.totalorder %s21, 0
    %p100 = por %p98, %p99
    %s102 = sadd.s32 %s101, 1
    %p105 = scmp.eq.s32.totalorder %s15, 1
    %p106 = scmp.ne.s32.totalorder %s101, %s103
    %p107 = scmp.eq.s32.totalorder %s15, 0
    %p108 = por %p106, %p107
    %p109 = scmp.ne.s32.totalorder %s101, %s103
    %p110 = scmp.eq.s32.totalorder %s20, 1
    %p111 = por %p109, %p110
    %p112 = scmp.ne.s32.totalorder %s103, %s104
    %p113 = scmp.eq.s32.totalorder %s20, 0
    %p114 = por %p112, %p113
    %p115 = scmp.ne.s32.totalorder %s103, %s104
    %p116 = scmp.eq.s32.totalorder %s21, 1
    %p117 = por %p115, %p116
    %p119 = scmp.ne.s32.totalorder %s104, %s118
    %p120 = scmp.eq.s32.totalorder %s21, 0
    %p121 = por %p119, %p120
    %s123 = sadd.s32 %s122, 1
    %p126 = scmp.eq.s32.totalorder %s15, 1
    %p127 = scmp.ne.s32.totalorder %s122, %s124
    %p128 = scmp.eq.s32.totalorder %s15, 0
    %p129 = por %p127, %p128
    %p130 = scmp.ne.s32.totalorder %s122, %s124
    %p131 = scmp.eq.s32.totalorder %s20, 1
    %p132 = por %p130, %p131
    %p133 = scmp.ne.s32.totalorder %s124, %s125
    %p134 = scmp.eq.s32.totalorder %s20, 0
    %p135 = por %p133, %p134
    %p136 = scmp.ne.s32.totalorder %s124, %s125
    %p137 = scmp.eq.s32.totalorder %s21, 1
    %p138 = por %p136, %p137
    %p140 = scmp.ne.s32.totalorder %s125, %s139
    %p141 = scmp.eq.s32.totalorder %s21, 0
    %p142 = por %p140, %p141
    %s144 = sadd.s32 %s143, 1
    %p147 = scmp.eq.s32.totalorder %s15, 1
    %p148 = scmp.ne.s32.totalorder %s143, %s145
    %p149 = scmp.eq.s32.totalorder %s15, 0
    %p150 = por %p148, %p149
    %p151 = scmp.ne.s32.totalorder %s143, %s145
    %p152 = scmp.eq.s32.totalorder %s20, 1
    %p153 = por %p151, %p152
    %p154 = scmp.ne.s32.totalorder %s145, %s146
    %p155 = scmp.eq.s32.totalorder %s20, 0
    %p156 = por %p154, %p155
    %p157 = scmp.ne.s32.totalorder %s145, %s146
    %p158 = scmp.eq.s32.totalorder %s21, 1
    %p159 = por %p157, %p158
    %p161 = scmp.ne.s32.totalorder %s146, %s160
    %p162 = scmp.eq.s32.totalorder %s21, 0
    %p163 = por %p161, %p162
    %s165 = sadd.s32 %s164, 1
    %p168 = scmp.eq.s32.totalorder %s15, 1
    %p169 = scmp.ne.s32.totalorder %s164, %s166
    %p170 = scmp.eq.s32.totalorder %s15, 0
    %p171 = por %p169, %p170
    %p172 = scmp.ne.s32.totalorder %s164, %s166
    %p173 = scmp.eq.s32.totalorder %s20, 1
    %p174 = por %p172, %p173
    %p175 = scmp.ne.s32.totalorder %s166, %s167
    %p176 = scmp.eq.s32.totalorder %s20, 0
    %p177 = por %p175, %p176
    %p178 = scmp.ne.s32.totalorder %s166, %s167
    %p179 = scmp.eq.s32.totalorder %s21, 1
    %p180 = por %p178, %p179
    %p182 = scmp.ne.s32.totalorder %s167, %s181
    %p183 = scmp.eq.s32.totalorder %s21, 0
    %p184 = por %p182, %p183
    %s186 = sadd.s32 %s185, 1
    %p189 = scmp.eq.s32.totalorder %s15, 1
    %p190 = scmp.ne.s32.totalorder %s185, %s187
    %p191 = scmp.eq.s32.totalorder %s15, 0
    %p192 = por %p190, %p191
    %p193 = scmp.ne.s32.totalorder %s185, %s187
    %p194 = scmp.eq.s32.totalorder %s20, 1
    %p195 = por %p193, %p194
    %p196 = scmp.ne.s32.totalorder %s187, %s188
    %p197 = scmp.eq.s32.totalorder %s20, 0
    %p198 = por %p196, %p197
    %p199 = scmp.ne.s32.totalorder %s187, %s188
    %p200 = scmp.eq.s32.totalorder %s21, 1
    %p201 = por %p199, %p200
    %p203 = scmp.ne.s32.totalorder %s188, %s202
    %p204 = scmp.eq.s32.totalorder %s21, 0
    %p205 = por %p203, %p204
    %s207 = sadd.s32 %s206, 1
    %p210 = scmp.eq.s32.totalorder %s15, 1
    %p211 = scmp.ne.s32.totalorder %s206, %s208
    %p212 = scmp.eq.s32.totalorder %s15, 0
    %p213 = por %p211, %p212
    %p214 = scmp.ne.s32.totalorder %s206, %s208
    %p215 = scmp.eq.s32.totalorder %s20, 1
    %p216 = por %p214, %p215
    %p217 = scmp.ne.s32.totalorder %s208, %s209
    %p218 = scmp.eq.s32.totalorder %s20, 0
    %p219 = por %p217, %p218
    %p220 = scmp.ne.s32.totalorder %s208, %s209
    %p221 = scmp.eq.s32.totalorder %s21, 1
    %p222 = por %p220, %p221
    %p224 = scmp.ne.s32.totalorder %s209, %s223
    %p225 = scmp.eq.s32.totalorder %s21, 0
    %p226 = por %p224, %p225
    %s227 = ssub.s32 %s15, %s22
    %p228 = scmp.eq.s32.totalorder %s227, 0
    %s230 = sadd.s32 %s229, 1
    %s231 = scalar_select %p228, %s229, %s230
    %p234 = pneg %p228
    %p235 = scmp.eq.s32.totalorder %s15, 1
    %p236 = por %p234, %p235
    %p237 = scmp.ne.s32.totalorder %s229, %s232
    %p238 = scmp.eq.s32.totalorder %s15, 0
    %p239 = por %p237, %p238
    %p240 = scmp.ne.s32.totalorder %s229, %s232
    %p241 = scmp.eq.s32.totalorder %s20, 1
    %p242 = por %p240, %p241
    %p243 = scmp.ne.s32.totalorder %s232, %s233
    %p244 = scmp.eq.s32.totalorder %s20, 0
    %p245 = por %p243, %p244
    %p246 = scmp.ne.s32.totalorder %s232, %s233
    %p247 = scmp.eq.s32.totalorder %s21, 1
    %p248 = por %p246, %p247
    %p250 = scmp.ne.s32.totalorder %s233, %s249
    %p251 = scmp.eq.s32.totalorder %s21, 0
    %p252 = por %p250, %p251
    %p253 = scmp.le.s32.totalorder 1, %s15
    %p254 = scmp.lt.s32.totalorder %s15, 3
    %p255 = pnand %p253, %p254
    %p256 = pneg %p255
    // Predicated region
    $region9: #{region_nonlocal_block.1} parent=5 // pred_check
      _
    $region10: #{region_nonlocal_block.1} parent=5 // pred_check_branch
      %258 = sbr.rel (%p255) target = $region12
    $region11: #{region_nonlocal_block.1} parent=5 // pred_region
      %s259 = ssub.s32 %s15, 1
      // Predicated region
      $region13: #{region_nonlocal_block.1} parent=11 // pred_check
        %p260 = pneg %p114
      $region14: #{region_nonlocal_block.1} parent=11 // pred_check_branch
        %262 = sbr.rel (%p260) target = $region16
      $region15: #{region_nonlocal_block.1} parent=11 // pred_region
        _
      $region16: #{region_nonlocal_block.1} parent=11 // pred_fallthru
        _
      // Predicated region
      $region17: #{region_nonlocal_block.1} parent=11 // pred_check
        %p263 = pneg %p135
      $region18: #{region_nonlocal_block.1} parent=11 // pred_check_branch
        %265 = sbr.rel (%p263) target = $region20
      $region19: #{region_nonlocal_block.1} parent=11 // pred_region
        _
      $region20: #{region_nonlocal_block.1} parent=11 // pred_fallthru
        _
      // Predicated region
      $region21: #{region_nonlocal_block.1} parent=11 // pred_check
        %p266 = pneg %p156
      $region22: #{region_nonlocal_block.1} parent=11 // pred_check_branch
        %268 = sbr.rel (%p266) target = $region24
      $region23: #{region_nonlocal_block.1} parent=11 // pred_region
        _
      $region24: #{region_nonlocal_block.1} parent=11 // pred_fallthru
        _
      // Predicated region
      $region25: #{region_nonlocal_block.1} parent=11 // pred_check
        %p269 = pneg %p177
      $region26: #{region_nonlocal_block.1} parent=11 // pred_check_branch
        %271 = sbr.rel (%p269) target = $region28
      $region27: #{region_nonlocal_block.1} parent=11 // pred_region
        _
      $region28: #{region_nonlocal_block.1} parent=11 // pred_fallthru
        _
      // Predicated region
      $region29: #{region_nonlocal_block.1} parent=11 // pred_check
        %p272 = pneg %p198
      $region30: #{region_nonlocal_block.1} parent=11 // pred_check_branch
        %274 = sbr.rel (%p272) target = $region32
      $region31: #{region_nonlocal_block.1} parent=11 // pred_region
        _
      $region32: #{region_nonlocal_block.1} parent=11 // pred_fallthru
        _
      // Predicated region
      $region33: #{region_nonlocal_block.1} parent=11 // pred_check
        %p275 = pneg %p219
      $region34: #{region_nonlocal_block.1} parent=11 // pred_check_branch
        %277 = sbr.rel (%p275) target = $region36
      $region35: #{region_nonlocal_block.1} parent=11 // pred_region
        _
      $region36: #{region_nonlocal_block.1} parent=11 // pred_fallthru
        _
    $region12: #{region_nonlocal_block.1} parent=5 // pred_fallthru
      _
    %p278 = scmp.lt.s32.totalorder %s15, 2
    // Predicated region
    $region37: #{region_nonlocal_block.1} parent=5 // pred_check
      %p279 = pneg %p278
    $region38: #{region_nonlocal_block.1} parent=5 // pred_check_branch
      %281 = sbr.rel (%p279) target = $region40
    $region39: #{region_nonlocal_block.1} parent=5 // pred_region
      // Predicated region
      $region41: #{region_nonlocal_block.1} parent=39 // pred_check
        %p282 = pneg %p35
      $region42: #{region_nonlocal_block.1} parent=39 // pred_check_branch
        %284 = sbr.rel (%p282) target = $region44
      $region43: #{region_nonlocal_block.1} parent=39 // pred_region
        %p285 = scmp.lt.s32.totalorder %s15, 1
        %s286 = scalar_select %p285, %s15, 1
        %s287 = smul.addr %s286, 48
        %s288 = smul.addr %s287, 8
        %s289 = scalar_lea.vmem %s0, %s288
      $region44: #{region_nonlocal_block.1} parent=39 // pred_fallthru
        _
      // Predicated region
      $region45: #{region_nonlocal_block.1} parent=39 // pred_check
        %p290 = pneg %p61
      $region46: #{region_nonlocal_block.1} parent=39 // pred_check_branch
        %292 = sbr.rel (%p290) target = $region48
      $region47: #{region_nonlocal_block.1} parent=39 // pred_region
        %p293 = scmp.lt.s32.totalorder %s15, 1
        %s294 = scalar_select %p293, %s15, 1
        %s295 = smul.addr %s294, 16
        %s296 = smul.addr %s295, 8
        %s297 = scalar_lea.vmem %s1, %s296
      $region48: #{region_nonlocal_block.1} parent=39 // pred_fallthru
        _
      // Predicated region
      $region49: #{region_nonlocal_block.1} parent=39 // pred_check
        %p298 = pneg %p87
      $region50: #{region_nonlocal_block.1} parent=39 // pred_check_branch
        %300 = sbr.rel (%p298) target = $region52
      $region51: #{region_nonlocal_block.1} parent=39 // pred_region
        %p301 = scmp.lt.s32.totalorder %s15, 1
        %s302 = scalar_select %p301, %s15, 1
        %s303 = smul.addr %s302, 2
        %s304 = smul.addr %s303, 4
        %s305 = scalar_lea.vmem %s2, %s304
      $region52: #{region_nonlocal_block.1} parent=39 // pred_fallthru
        _
    $region40: #{region_nonlocal_block.1} parent=5 // pred_fallthru
      _
    %p306 = scmp.le.s32.totalorder 1, %s15
    %p307 = scmp.lt.s32.totalorder %s15, 3
    %p308 = pnand %p306, %p307
    %p309 = pneg %p308
    // Predicated region
    $region53: #{region_nonlocal_block.1} parent=5 // pred_check
      _
    $region54: #{region_nonlocal_block.1} parent=5 // pred_check_branch
      %311 = sbr.rel (%p308) target = $region56
    $region55: #{region_nonlocal_block.1} parent=5 // pred_region
      %s312 = ssub.s32 %s15, 1
      %p313 = scmp.lt.s32.totalorder %s20, 1
      %s314 = scalar_select %p313, %s20, 1
      %s315 = smul.addr %s314, 48
      %s316 = smul.addr %s315, 8
      %s317 = scalar_lea.vmem %s0, %s316
      %p318 = pneg %p41
      %p319 = pneg %p38
      %p320 = scmp.lt.s32.totalorder %s20, 1
      %s321 = scalar_select %p320, %s20, 1
      %s322 = smul.addr %s321, 16
      %s323 = smul.addr %s322, 8
      %s324 = scalar_lea.vmem %s1, %s323
      %p325 = pneg %p67
      %p326 = pneg %p64
      %p327 = scmp.lt.s32.totalorder %s20, 1
      %s328 = scalar_select %p327, %s20, 1
      %s329 = smul.addr %s328, 2
      %s330 = smul.addr %s329, 4
      %s331 = scalar_lea.vmem %s2, %s330
      %p332 = pneg %p93
      %p333 = pneg %p90
      %p334 = pneg %p114
      %p335 = pneg %p111
      %p336 = pneg %p135
      %p337 = pneg %p132
      %p338 = pneg %p156
      %p339 = pneg %p153
      %p340 = pneg %p177
      %p341 = pneg %p174
      %p342 = pneg %p198
      %p343 = pneg %p195
      %p344 = pneg %p219
      %p345 = pneg %p216
      %p346 = pneg %p245
      %p347 = pneg %p242
      %p348 = scmp.lt.s32.totalorder %s20, 1
      %s349 = scalar_select %p348, %s20, 1
      %s350 = smul.addr %s349, 2
      %s351 = smul.addr %s350, 4
      %s352 = scalar_lea.vmem %s9, %s351
      %p353 = scmp.lt.s32.totalorder %s20, 1
      %s354 = scalar_select %p353, %s20, 1
      %s355 = smul.addr %s354, 48
      %s356 = smul.addr %s355, 8
      %s357 = scalar_lea.vmem %s0, %s356
      %p358 = scmp.lt.s32.totalorder %s20, 1
      %s359 = scalar_select %p358, %s20, 1
      %s360 = smul.addr %s359, 16
      %s361 = smul.addr %s360, 8
      %s362 = scalar_lea.vmem %s1, %s361
      %p363 = scmp.lt.s32.totalorder %s20, 1
      %s364 = scalar_select %p363, %s20, 1
      %s365 = smul.addr %s364, 2
      %s366 = smul.addr %s365, 4
      %s367 = scalar_lea.vmem %s2, %s366
      %p368 = scmp.lt.s32.totalorder %s20, 1
      %s369 = scalar_select %p368, %s20, 1
      %s370 = smul.addr %s369, 2
      %s371 = smul.addr %s370, 4
      %s372 = scalar_lea.vmem %s9, %s371
      %v373 = vld [vmem:[%s357] sm:$0xff]
      %v374 = vld [vmem:[%s357 + $0x8] sm:$0xff]
      %v375 = vld [vmem:[%s357 + $0x10] sm:$0xff]
      %v376 = vld [vmem:[%s357 + $0x18] sm:$0xff]
      %v377 = vld [vmem:[%s357 + $0x20] sm:$0xff]
      %v378 = vld [vmem:[%s357 + $0x28] sm:$0xff]
      %v379 = vld [vmem:[%s357 + $0x30] sm:$0xff]
      %v380 = vld [vmem:[%s357 + $0x38] sm:$0xff]
      %v381 = vld [vmem:[%s357 + $0x40] sm:$0xff]
      %v382 = vld [vmem:[%s357 + $0x48] sm:$0xff]
      %v383 = vld [vmem:[%s357 + $0x50] sm:$0xff]
      %v384 = vld [vmem:[%s357 + $0x58] sm:$0xff]
      %v385 = vld [vmem:[%s357 + $0x60] sm:$0xff]
      %v386 = vld [vmem:[%s357 + $0x68] sm:$0xff]
      %v387 = vld [vmem:[%s357 + $0x70] sm:$0xff]
      %v388 = vld [vmem:[%s357 + $0x78] sm:$0xff]
      %v389 = vld [vmem:[%s357 + $0x80] sm:$0xff]
      %v390 = vld [vmem:[%s357 + $0x88] sm:$0xff]
      %v391 = vld [vmem:[%s357 + $0x90] sm:$0xff]
      %v392 = vld [vmem:[%s357 + $0x98] sm:$0xff]
      %v393 = vld [vmem:[%s357 + $0xa0] sm:$0xff]
      %v394 = vld [vmem:[%s357 + $0xa8] sm:$0xff]
      %v395 = vld [vmem:[%s357 + $0xb0] sm:$0xff]
      %v396 = vld [vmem:[%s357 + $0xb8] sm:$0xff]
      %v397 = vld [vmem:[%s357 + $0xc0] sm:$0xff]
      %v398 = vld [vmem:[%s357 + $0xc8] sm:$0xff]
      %v399 = vld [vmem:[%s357 + $0xd0] sm:$0xff]
      %v400 = vld [vmem:[%s357 + $0xd8] sm:$0xff]
      %v401 = vld [vmem:[%s357 + $0xe0] sm:$0xff]
      %v402 = vld [vmem:[%s357 + $0xe8] sm:$0xff]
      %v403 = vld [vmem:[%s357 + $0xf0] sm:$0xff]
      %v404 = vld [vmem:[%s357 + $0xf8] sm:$0xff]
      %v405 = vld [vmem:[%s357 + $0x100] sm:$0xff]
      %v406 = vld [vmem:[%s357 + $0x108] sm:$0xff]
      %v407 = vld [vmem:[%s357 + $0x110] sm:$0xff]
      %v408 = vld [vmem:[%s357 + $0x118] sm:$0xff]
      %v409 = vld [vmem:[%s357 + $0x120] sm:$0xff]
      %v410 = vld [vmem:[%s357 + $0x128] sm:$0xff]
      %v411 = vld [vmem:[%s357 + $0x130] sm:$0xff]
      %v412 = vld [vmem:[%s357 + $0x138] sm:$0xff]
      %v413 = vld [vmem:[%s357 + $0x140] sm:$0xff]
      %v414 = vld [vmem:[%s357 + $0x148] sm:$0xff]
      %v415 = vld [vmem:[%s357 + $0x150] sm:$0xff]
      %v416 = vld [vmem:[%s357 + $0x158] sm:$0xff]
      %v417 = vld [vmem:[%s357 + $0x160] sm:$0xff]
      %v418 = vld [vmem:[%s357 + $0x168] sm:$0xff]
      %v419 = vld [vmem:[%s357 + $0x170] sm:$0xff]
      %v420 = vld [vmem:[%s357 + $0x178] sm:$0xff]
      %v421 = vld [vmem:[%s3] sm:$0xff]
      %v422 = vld [vmem:[%s3 + $0x8] sm:$0xff]
      %v423 = vld [vmem:[%s3 + $0x10] sm:$0xff]
      %v424 = vld [vmem:[%s3 + $0x18] sm:$0xff]
      %v425 = vld [vmem:[%s3 + $0x20] sm:$0xf]
      %v426 = vld [vmem:[%s4] sm:$0x1]
      %v428 = vlaneseq
      %v429 = vshrl.u32 %v428, 7
      %v430 = vsub.s32 0, %v429
      %v431 = vrot.slane %v426, %v430
      %vm433 = vcmask 293888
      %v435 = vsel %vm433, %v373, 0
      %v438 = vsel %vm433, %v374, 0
      %v441 = vsel %vm433, %v375, 0
      %v444 = vsel %vm433, %v376, 0
      %v447 = vsel %vm433, %v377, 0
      %v450 = vsel %vm433, %v378, 0
      %v453 = vsel %vm433, %v379, 0
      %v456 = vsel %vm433, %v380, 0
      %v459 = vsel %vm433, %v381, 0
      %v462 = vsel %vm433, %v382, 0
      %v465 = vsel %vm433, %v383, 0
      %v468 = vsel %vm433, %v384, 0
      %v471 = vsel %vm433, %v385, 0
      %v474 = vsel %vm433, %v386, 0
      %v477 = vsel %vm433, %v387, 0
      %v480 = vsel %vm433, %v388, 0
      %v483 = vsel %vm433, %v389, 0
      %v486 = vsel %vm433, %v390, 0
      %v489 = vsel %vm433, %v391, 0
      %v492 = vsel %vm433, %v392, 0
      %v495 = vsel %vm433, %v393, 0
      %v498 = vsel %vm433, %v394, 0
      %v501 = vsel %vm433, %v395, 0
      %v504 = vsel %vm433, %v396, 0
      %v507 = vsel %vm433, %v397, 0
      %v510 = vsel %vm433, %v398, 0
      %v513 = vsel %vm433, %v399, 0
      %v516 = vsel %vm433, %v400, 0
      %v519 = vsel %vm433, %v401, 0
      %v522 = vsel %vm433, %v402, 0
      %v525 = vsel %vm433, %v403, 0
      %v528 = vsel %vm433, %v404, 0
      %v531 = vsel %vm433, %v405, 0
      %v534 = vsel %vm433, %v406, 0
      %v537 = vsel %vm433, %v407, 0
      %v540 = vsel %vm433, %v408, 0
      %v543 = vsel %vm433, %v409, 0
      %v546 = vsel %vm433, %v410, 0
      %v549 = vsel %vm433, %v411, 0
      %v552 = vsel %vm433, %v412, 0
      %v555 = vsel %vm433, %v413, 0
      %v558 = vsel %vm433, %v414, 0
      %v561 = vsel %vm433, %v415, 0
      %v564 = vsel %vm433, %v416, 0
      %v567 = vsel %vm433, %v417, 0
      %v570 = vsel %vm433, %v418, 0
      %v573 = vsel %vm433, %v419, 0
      %v576 = vsel %vm433, %v420, 0
      %vm578 = vcmask 1043456
      %v580 = vsel %vm578, %v425, 0
      %582 = vmatprep.subr.mxu0 0.0
      %583 = vmatpush1.msra.mxu0 0.0
      %584 = vmatprep.subr.mxu0 0.0
      %585 = vmatpush1.msra.mxu0 0.0
      %586 = vmatprep.subr.mxu0 0.0
      %587 = vmatpush1.msra.mxu0 0.0
      %588 = vmatprep.subr.mxu0 0.0
      %589 = vmatpush1.msra.mxu0 0.0
      %590 = vmatprep.subr.mxu0 0.0
      %591 = vmatpush1.msra.mxu0 0.0
      %592 = vmatprep.subr.mxu0 0.0
      %593 = vmatpush1.msra.mxu0 0.0
      %594 = vmatprep.subr.mxu0 0.0
      %595 = vmatpush1.msra.mxu0 0.0
      %596 = vmatprep.subr.mxu0 0.0
      %597 = vmatpush1.msra.mxu0 0.0
      %598 = vmatprep.subr.mxu0 0.0
      %599 = vmatpush1.msra.mxu0 0.0
      %600 = vmatprep.subr.mxu0 0.0
      %601 = vmatpush1.msra.mxu0 0.0
      %602 = vmatprep.subr.mxu0 0.0
      %603 = vmatpush1.msra.mxu0 0.0
      %604 = vmatprep.subr.mxu0 0.0
      %605 = vmatpush1.msra.mxu0 %v580
      %606 = vmatprep.subr.mxu0 0.0
      %607 = vmatpush1.msra.mxu0 %v424
      %608 = vmatprep.subr.mxu0 0.0
      %609 = vmatpush1.msra.mxu0 %v423
      %610 = vmatprep.subr.mxu0 0.0
      %611 = vmatpush1.msra.mxu0 %v422
      %612 = vmatprep.subr.mxu0 0.0
      %613 = vmatpush1.msra.mxu0 %v421
      %614 = vmatprep.subr.mxu0 0.0
      %615 = vmatpush2.msra.mxu0 0.0
      %616 = vmatprep.subr.mxu0 0.0
      %617 = vmatpush2.msra.mxu0 0.0
      %618 = vmatprep.subr.mxu0 0.0
      %619 = vmatpush2.msra.mxu0 0.0
      %620 = vmatprep.subr.mxu0 0.0
      %621 = vmatpush2.msra.mxu0 0.0
      %622 = vmatprep.subr.mxu0 0.0
      %623 = vmatpush2.msra.mxu0 0.0
      %624 = vmatprep.subr.mxu0 0.0
      %625 = vmatpush2.msra.mxu0 0.0
      %626 = vmatprep.subr.mxu0 0.0
      %627 = vmatpush2.msra.mxu0 0.0
      %628 = vmatprep.subr.mxu0 0.0
      %629 = vmatpush2.msra.mxu0 0.0
      %630 = vmatprep.subr.mxu0 0.0
      %631 = vmatpush2.msra.mxu0 0.0
      %632 = vmatprep.subr.mxu0 0.0
      %633 = vmatpush2.msra.mxu0 0.0
      %634 = vmatprep.subr.mxu0 0.0
      %635 = vmatpush2.msra.mxu0 0.0
      %636 = vmatprep.subr.mxu0 0.0
      %637 = vmatpush2.msra.mxu0 0.0
      %638 = vmatprep.subr.mxu0 0.0
      %639 = vmatpush2.msra.mxu0 0.0
      %640 = vmatprep.subr.mxu0 0.0
      %641 = vmatpush2.msra.mxu0 0.0
      %642 = vmatprep.subr.mxu0 0.0
      %643 = vmatpush2.msra.mxu0 0.0
      %644 = vmatprep.subr.mxu0 0.0
      %645 = vmatpush2.msra.mxu0 0.0
      %646 = vmatprep.mubr.f32.mxu0 0.0
      %647 = vmatmul.mubr.f32.gmra.mxu0 %v435
      %v648 = vpop.f32.mrf.mxu0
      %v649 = vadd.f32 %v431, %v648
      %v650 = vpop.f32.mrf.mxu0
      %651 = vmatprep.mubr.f32.mxu0 0.0
      %652 = vmatmul.mubr.f32.gmra.mxu0 %v438
      %v653 = vpop.f32.mrf.mxu0
      %v654 = vadd.f32 %v431, %v653
      %v655 = vpop.f32.mrf.mxu0
      %656 = vmatprep.mubr.f32.mxu0 0.0
      %657 = vmatmul.mubr.f32.gmra.mxu0 %v441
      %v658 = vpop.f32.mrf.mxu0
      %v659 = vadd.f32 %v431, %v658
      %v660 = vpop.f32.mrf.mxu0
      %661 = vmatprep.mubr.f32.mxu0 0.0
      %662 = vmatmul.mubr.f32.gmra.mxu0 %v444
      %v663 = vpop.f32.mrf.mxu0
      %v664 = vadd.f32 %v431, %v663
      %v665 = vpop.f32.mrf.mxu0
      %666 = vmatprep.mubr.f32.mxu0 0.0
      %667 = vmatmul.mubr.f32.gmra.mxu0 %v447
      %v668 = vpop.f32.mrf.mxu0
      %v669 = vadd.f32 %v431, %v668
      %v670 = vpop.f32.mrf.mxu0
      %671 = vmatprep.mubr.f32.mxu0 0.0
      %672 = vmatmul.mubr.f32.gmra.mxu0 %v450
      %v673 = vpop.f32.mrf.mxu0
      %v674 = vadd.f32 %v431, %v673
      %v675 = vpop.f32.mrf.mxu0
      %676 = vmatprep.mubr.f32.mxu0 0.0
      %677 = vmatmul.mubr.f32.gmra.mxu0 %v453
      %v678 = vpop.f32.mrf.mxu0
      %v679 = vadd.f32 %v431, %v678
      %v680 = vpop.f32.mrf.mxu0
      %681 = vmatprep.mubr.f32.mxu0 0.0
      %682 = vmatmul.mubr.f32.gmra.mxu0 %v456
      %v683 = vpop.f32.mrf.mxu0
      %v684 = vadd.f32 %v431, %v683
      %v685 = vpop.f32.mrf.mxu0
      %686 = vmatprep.mubr.f32.mxu0 0.0
      %687 = vmatmul.mubr.f32.gmra.mxu0 %v459
      %v688 = vpop.f32.mrf.mxu0
      %v689 = vadd.f32 %v431, %v688
      %v690 = vpop.f32.mrf.mxu0
      %691 = vmatprep.mubr.f32.mxu0 0.0
      %692 = vmatmul.mubr.f32.gmra.mxu0 %v462
      %v693 = vpop.f32.mrf.mxu0
      %v694 = vadd.f32 %v431, %v693
      %v695 = vpop.f32.mrf.mxu0
      %696 = vmatprep.mubr.f32.mxu0 0.0
      %697 = vmatmul.mubr.f32.gmra.mxu0 %v465
      %v698 = vpop.f32.mrf.mxu0
      %v699 = vadd.f32 %v431, %v698
      %v700 = vpop.f32.mrf.mxu0
      %701 = vmatprep.mubr.f32.mxu0 0.0
      %702 = vmatmul.mubr.f32.gmra.mxu0 %v468
      %v703 = vpop.f32.mrf.mxu0
      %v704 = vadd.f32 %v431, %v703
      %v705 = vpop.f32.mrf.mxu0
      %706 = vmatprep.mubr.f32.mxu0 0.0
      %707 = vmatmul.mubr.f32.gmra.mxu0 %v471
      %v708 = vpop.f32.mrf.mxu0
      %v709 = vadd.f32 %v431, %v708
      %v710 = vpop.f32.mrf.mxu0
      %711 = vmatprep.mubr.f32.mxu0 0.0
      %712 = vmatmul.mubr.f32.gmra.mxu0 %v474
      %v713 = vpop.f32.mrf.mxu0
      %v714 = vadd.f32 %v431, %v713
      %v715 = vpop.f32.mrf.mxu0
      %716 = vmatprep.mubr.f32.mxu0 0.0
      %717 = vmatmul.mubr.f32.gmra.mxu0 %v477
      %v718 = vpop.f32.mrf.mxu0
      %v719 = vadd.f32 %v431, %v718
      %v720 = vpop.f32.mrf.mxu0
      %721 = vmatprep.mubr.f32.mxu0 0.0
      %722 = vmatmul.mubr.f32.gmra.mxu0 %v480
      %v723 = vpop.f32.mrf.mxu0
      %v724 = vadd.f32 %v431, %v723
      %v725 = vpop.f32.mrf.mxu0
      %726 = vmatprep.mubr.f32.mxu0 0.0
      %727 = vmatmul.mubr.f32.gmra.mxu0 %v483
      %v728 = vpop.f32.mrf.mxu0
      %v729 = vadd.f32 %v431, %v728
      %v730 = vpop.f32.mrf.mxu0
      %731 = vmatprep.mubr.f32.mxu0 0.0
      %732 = vmatmul.mubr.f32.gmra.mxu0 %v486
      %v733 = vpop.f32.mrf.mxu0
      %v734 = vadd.f32 %v431, %v733
      %v735 = vpop.f32.mrf.mxu0
      %736 = vmatprep.mubr.f32.mxu0 0.0
      %737 = vmatmul.mubr.f32.gmra.mxu0 %v489
      %v738 = vpop.f32.mrf.mxu0
      %v739 = vadd.f32 %v431, %v738
      %v740 = vpop.f32.mrf.mxu0
      %741 = vmatprep.mubr.f32.mxu0 0.0
      %742 = vmatmul.mubr.f32.gmra.mxu0 %v492
      %v743 = vpop.f32.mrf.mxu0
      %v744 = vadd.f32 %v431, %v743
      %v745 = vpop.f32.mrf.mxu0
      %746 = vmatprep.mubr.f32.mxu0 0.0
      %747 = vmatmul.mubr.f32.gmra.mxu0 %v495
      %v748 = vpop.f32.mrf.mxu0
      %v749 = vadd.f32 %v431, %v748
      %v750 = vpop.f32.mrf.mxu0
      %751 = vmatprep.mubr.f32.mxu0 0.0
      %752 = vmatmul.mubr.f32.gmra.mxu0 %v498
      %v753 = vpop.f32.mrf.mxu0
      %v754 = vadd.f32 %v431, %v753
      %v755 = vpop.f32.mrf.mxu0
      %756 = vmatprep.mubr.f32.mxu0 0.0
      %757 = vmatmul.mubr.f32.gmra.mxu0 %v501
      %v758 = vpop.f32.mrf.mxu0
      %v759 = vadd.f32 %v431, %v758
      %v760 = vpop.f32.mrf.mxu0
      %761 = vmatprep.mubr.f32.mxu0 0.0
      %762 = vmatmul.mubr.f32.gmra.mxu0 %v504
      %v763 = vpop.f32.mrf.mxu0
      %v764 = vadd.f32 %v431, %v763
      %v765 = vpop.f32.mrf.mxu0
      %766 = vmatprep.mubr.f32.mxu0 0.0
      %767 = vmatmul.mubr.f32.gmra.mxu0 %v507
      %v768 = vpop.f32.mrf.mxu0
      %v769 = vadd.f32 %v431, %v768
      %v770 = vpop.f32.mrf.mxu0
      %771 = vmatprep.mubr.f32.mxu0 0.0
      %772 = vmatmul.mubr.f32.gmra.mxu0 %v510
      %v773 = vpop.f32.mrf.mxu0
      %v774 = vadd.f32 %v431, %v773
      %v775 = vpop.f32.mrf.mxu0
      %776 = vmatprep.mubr.f32.mxu0 0.0
      %777 = vmatmul.mubr.f32.gmra.mxu0 %v513
      %v778 = vpop.f32.mrf.mxu0
      %v779 = vadd.f32 %v431, %v778
      %v780 = vpop.f32.mrf.mxu0
      %781 = vmatprep.mubr.f32.mxu0 0.0
      %782 = vmatmul.mubr.f32.gmra.mxu0 %v516
      %v783 = vpop.f32.mrf.mxu0
      %v784 = vadd.f32 %v431, %v783
      %v785 = vpop.f32.mrf.mxu0
      %786 = vmatprep.mubr.f32.mxu0 0.0
      %787 = vmatmul.mubr.f32.gmra.mxu0 %v519
      %v788 = vpop.f32.mrf.mxu0
      %v789 = vadd.f32 %v431, %v788
      %v790 = vpop.f32.mrf.mxu0
      %791 = vmatprep.mubr.f32.mxu0 0.0
      %792 = vmatmul.mubr.f32.gmra.mxu0 %v522
      %v793 = vpop.f32.mrf.mxu0
      %v794 = vadd.f32 %v431, %v793
      %v795 = vpop.f32.mrf.mxu0
      %796 = vmatprep.mubr.f32.mxu0 0.0
      %797 = vmatmul.mubr.f32.gmra.mxu0 %v525
      %v798 = vpop.f32.mrf.mxu0
      %v799 = vadd.f32 %v431, %v798
      %v800 = vpop.f32.mrf.mxu0
      %801 = vmatprep.mubr.f32.mxu0 0.0
      %802 = vmatmul.mubr.f32.gmra.mxu0 %v528
      %v803 = vpop.f32.mrf.mxu0
      %v804 = vadd.f32 %v431, %v803
      %v805 = vpop.f32.mrf.mxu0
      %806 = vmatprep.mubr.f32.mxu0 0.0
      %807 = vmatmul.mubr.f32.gmra.mxu0 %v531
      %v808 = vpop.f32.mrf.mxu0
      %v809 = vadd.f32 %v431, %v808
      %v810 = vpop.f32.mrf.mxu0
      %811 = vmatprep.mubr.f32.mxu0 0.0
      %812 = vmatmul.mubr.f32.gmra.mxu0 %v534
      %v813 = vpop.f32.mrf.mxu0
      %v814 = vadd.f32 %v431, %v813
      %v815 = vpop.f32.mrf.mxu0
      %816 = vmatprep.mubr.f32.mxu0 0.0
      %817 = vmatmul.mubr.f32.gmra.mxu0 %v537
      %v818 = vpop.f32.mrf.mxu0
      %v819 = vadd.f32 %v431, %v818
      %v820 = vpop.f32.mrf.mxu0
      %821 = vmatprep.mubr.f32.mxu0 0.0
      %822 = vmatmul.mubr.f32.gmra.mxu0 %v540
      %v823 = vpop.f32.mrf.mxu0
      %v824 = vadd.f32 %v431, %v823
      %v825 = vpop.f32.mrf.mxu0
      %826 = vmatprep.mubr.f32.mxu0 0.0
      %827 = vmatmul.mubr.f32.gmra.mxu0 %v543
      %v828 = vpop.f32.mrf.mxu0
      %v829 = vadd.f32 %v431, %v828
      %v830 = vpop.f32.mrf.mxu0
      %831 = vmatprep.mubr.f32.mxu0 0.0
      %832 = vmatmul.mubr.f32.gmra.mxu0 %v546
      %v833 = vpop.f32.mrf.mxu0
      %v834 = vadd.f32 %v431, %v833
      %v835 = vpop.f32.mrf.mxu0
      %836 = vmatprep.mubr.f32.mxu0 0.0
      %837 = vmatmul.mubr.f32.gmra.mxu0 %v549
      %v838 = vpop.f32.mrf.mxu0
      %v839 = vadd.f32 %v431, %v838
      %v840 = vpop.f32.mrf.mxu0
      %841 = vmatprep.mubr.f32.mxu0 0.0
      %842 = vmatmul.mubr.f32.gmra.mxu0 %v552
      %v843 = vpop.f32.mrf.mxu0
      %v844 = vadd.f32 %v431, %v843
      %v845 = vpop.f32.mrf.mxu0
      %846 = vmatprep.mubr.f32.mxu0 0.0
      %847 = vmatmul.mubr.f32.gmra.mxu0 %v555
      %v848 = vpop.f32.mrf.mxu0
      %v849 = vadd.f32 %v431, %v848
      %v850 = vpop.f32.mrf.mxu0
      %851 = vmatprep.mubr.f32.mxu0 0.0
      %852 = vmatmul.mubr.f32.gmra.mxu0 %v558
      %v853 = vpop.f32.mrf.mxu0
      %v854 = vadd.f32 %v431, %v853
      %v855 = vpop.f32.mrf.mxu0
      %856 = vmatprep.mubr.f32.mxu0 0.0
      %857 = vmatmul.mubr.f32.gmra.mxu0 %v561
      %v858 = vpop.f32.mrf.mxu0
      %v859 = vadd.f32 %v431, %v858
      %v860 = vpop.f32.mrf.mxu0
      %861 = vmatprep.mubr.f32.mxu0 0.0
      %862 = vmatmul.mubr.f32.gmra.mxu0 %v564
      %v863 = vpop.f32.mrf.mxu0
      %v864 = vadd.f32 %v431, %v863
      %v865 = vpop.f32.mrf.mxu0
      %866 = vmatprep.mubr.f32.mxu0 0.0
      %867 = vmatmul.mubr.f32.gmra.mxu0 %v567
      %v868 = vpop.f32.mrf.mxu0
      %v869 = vadd.f32 %v431, %v868
      %v870 = vpop.f32.mrf.mxu0
      %871 = vmatprep.mubr.f32.mxu0 0.0
      %872 = vmatmul.mubr.f32.gmra.mxu0 %v570
      %v873 = vpop.f32.mrf.mxu0
      %v874 = vadd.f32 %v431, %v873
      %v875 = vpop.f32.mrf.mxu0
      %876 = vmatprep.mubr.f32.mxu0 0.0
      %877 = vmatmul.mubr.f32.gmra.mxu0 %v573
      %v878 = vpop.f32.mrf.mxu0
      %v879 = vadd.f32 %v431, %v878
      %v880 = vpop.f32.mrf.mxu0
      %881 = vmatprep.mubr.f32.mxu0 0.0
      %882 = vmatmul.mubr.f32.gmra.mxu0 %v576
      %v883 = vpop.f32.mrf.mxu0
      %v884 = vadd.f32 %v431, %v883
      %v885 = vpop.f32.mrf.mxu0
      %886 = vdwg.mxu0
      %v887 = vld [vmem:[%s362] sm:$0xff]
      %v888 = vld [vmem:[%s362 + $0x8] sm:$0xff]
      %v889 = vld [vmem:[%s362 + $0x10] sm:$0xff]
      %v890 = vld [vmem:[%s362 + $0x18] sm:$0xff]
      %v891 = vld [vmem:[%s362 + $0x20] sm:$0xff]
      %v892 = vld [vmem:[%s362 + $0x28] sm:$0xff]
      %v893 = vld [vmem:[%s362 + $0x30] sm:$0xff]
      %v894 = vld [vmem:[%s362 + $0x38] sm:$0xff]
      %v895 = vld [vmem:[%s362 + $0x40] sm:$0xff]
      %v896 = vld [vmem:[%s362 + $0x48] sm:$0xff]
      %v897 = vld [vmem:[%s362 + $0x50] sm:$0xff]
      %v898 = vld [vmem:[%s362 + $0x58] sm:$0xff]
      %v899 = vld [vmem:[%s362 + $0x60] sm:$0xff]
      %v900 = vld [vmem:[%s362 + $0x68] sm:$0xff]
      %v901 = vld [vmem:[%s362 + $0x70] sm:$0xff]
      %v902 = vld [vmem:[%s362 + $0x78] sm:$0xff]
      %v903 = vld [vmem:[%s5] sm:$0xf]
      %v904 = vld [vmem:[%s6] sm:$0x1]
      %v906 = vlaneseq
      %v907 = vshrl.u32 %v906, 7
      %v908 = vsub.s32 0, %v907
      %v909 = vrot.slane %v904, %v908
      %vm911 = vcmask 31744
      %v913 = vsel %vm911, %v887, 0
      %v916 = vsel %vm911, %v888, 0
      %v919 = vsel %vm911, %v889, 0
      %v922 = vsel %vm911, %v890, 0
      %v925 = vsel %vm911, %v891, 0
      %v928 = vsel %vm911, %v892, 0
      %v931 = vsel %vm911, %v893, 0
      %v934 = vsel %vm911, %v894, 0
      %v937 = vsel %vm911, %v895, 0
      %v940 = vsel %vm911, %v896, 0
      %v943 = vsel %vm911, %v897, 0
      %v946 = vsel %vm911, %v898, 0
      %v949 = vsel %vm911, %v899, 0
      %v952 = vsel %vm911, %v900, 0
      %v955 = vsel %vm911, %v901, 0
      %v958 = vsel %vm911, %v902, 0
      %v961 = vsel %vm578, %v903, 0
      %963 = vmatprep.subr.mxu0 0.0
      %964 = vmatpush1.msra.mxu0 0.0
      %965 = vmatprep.subr.mxu0 0.0
      %966 = vmatpush1.msra.mxu0 0.0
      %967 = vmatprep.subr.mxu0 0.0
      %968 = vmatpush1.msra.mxu0 0.0
      %969 = vmatprep.subr.mxu0 0.0
      %970 = vmatpush1.msra.mxu0 0.0
      %971 = vmatprep.subr.mxu0 0.0
      %972 = vmatpush1.msra.mxu0 0.0
      %973 = vmatprep.subr.mxu0 0.0
      %974 = vmatpush1.msra.mxu0 0.0
      %975 = vmatprep.subr.mxu0 0.0
      %976 = vmatpush1.msra.mxu0 0.0
      %977 = vmatprep.subr.mxu0 0.0
      %978 = vmatpush1.msra.mxu0 0.0
      %979 = vmatprep.subr.mxu0 0.0
      %980 = vmatpush1.msra.mxu0 0.0
      %981 = vmatprep.subr.mxu0 0.0
      %982 = vmatpush1.msra.mxu0 0.0
      %983 = vmatprep.subr.mxu0 0.0
      %984 = vmatpush1.msra.mxu0 0.0
      %985 = vmatprep.subr.mxu0 0.0
      %986 = vmatpush1.msra.mxu0 0.0
      %987 = vmatprep.subr.mxu0 0.0
      %988 = vmatpush1.msra.mxu0 0.0
      %989 = vmatprep.subr.mxu0 0.0
      %990 = vmatpush1.msra.mxu0 0.0
      %991 = vmatprep.subr.mxu0 0.0
      %992 = vmatpush1.msra.mxu0 0.0
      %993 = vmatprep.subr.mxu0 0.0
      %994 = vmatpush1.msra.mxu0 %v961
      %995 = vmatprep.subr.mxu0 0.0
      %996 = vmatpush2.msra.mxu0 0.0
      %997 = vmatprep.subr.mxu0 0.0
      %998 = vmatpush2.msra.mxu0 0.0
      %999 = vmatprep.subr.mxu0 0.0
      %1000 = vmatpush2.msra.mxu0 0.0
      %1001 = vmatprep.subr.mxu0 0.0
      %1002 = vmatpush2.msra.mxu0 0.0
      %1003 = vmatprep.subr.mxu0 0.0
      %1004 = vmatpush2.msra.mxu0 0.0
      %1005 = vmatprep.subr.mxu0 0.0
      %1006 = vmatpush2.msra.mxu0 0.0
      %1007 = vmatprep.subr.mxu0 0.0
      %1008 = vmatpush2.msra.mxu0 0.0
      %1009 = vmatprep.subr.mxu0 0.0
      %1010 = vmatpush2.msra.mxu0 0.0
      %1011 = vmatprep.subr.mxu0 0.0
      %1012 = vmatpush2.msra.mxu0 0.0
      %1013 = vmatprep.subr.mxu0 0.0
      %1014 = vmatpush2.msra.mxu0 0.0
      %1015 = vmatprep.subr.mxu0 0.0
      %1016 = vmatpush2.msra.mxu0 0.0
      %1017 = vmatprep.subr.mxu0 0.0
      %1018 = vmatpush2.msra.mxu0 0.0
      %1019 = vmatprep.subr.mxu0 0.0
      %1020 = vmatpush2.msra.mxu0 0.0
      %1021 = vmatprep.subr.mxu0 0.0
      %1022 = vmatpush2.msra.mxu0 0.0
      %1023 = vmatprep.subr.mxu0 0.0
      %1024 = vmatpush2.msra.mxu0 0.0
      %1025 = vmatprep.subr.mxu0 0.0
      %1026 = vmatpush2.msra.mxu0 0.0
      %1027 = vmatprep.mubr.f32.mxu0 0.0
      %1028 = vmatmul.mubr.f32.gmra.mxu0 %v913
      %v1029 = vpop.f32.mrf.mxu0
      %v1030 = vadd.f32 %v909, %v1029
      %v1031 = vpop.f32.mrf.mxu0
      %1032 = vmatprep.mubr.f32.mxu0 0.0
      %1033 = vmatmul.mubr.f32.gmra.mxu0 %v916
      %v1034 = vpop.f32.mrf.mxu0
      %v1035 = vadd.f32 %v909, %v1034
      %v1036 = vpop.f32.mrf.mxu0
      %1037 = vmatprep.mubr.f32.mxu0 0.0
      %1038 = vmatmul.mubr.f32.gmra.mxu0 %v919
      %v1039 = vpop.f32.mrf.mxu0
      %v1040 = vadd.f32 %v909, %v1039
      %v1041 = vpop.f32.mrf.mxu0
      %1042 = vmatprep.mubr.f32.mxu0 0.0
      %1043 = vmatmul.mubr.f32.gmra.mxu0 %v922
      %v1044 = vpop.f32.mrf.mxu0
      %v1045 = vadd.f32 %v909, %v1044
      %v1046 = vpop.f32.mrf.mxu0
      %1047 = vmatprep.mubr.f32.mxu0 0.0
      %1048 = vmatmul.mubr.f32.gmra.mxu0 %v925
      %v1049 = vpop.f32.mrf.mxu0
      %v1050 = vadd.f32 %v909, %v1049
      %v1051 = vpop.f32.mrf.mxu0
      %1052 = vmatprep.mubr.f32.mxu0 0.0
      %1053 = vmatmul.mubr.f32.gmra.mxu0 %v928
      %v1054 = vpop.f32.mrf.mxu0
      %v1055 = vadd.f32 %v909, %v1054
      %v1056 = vpop.f32.mrf.mxu0
      %1057 = vmatprep.mubr.f32.mxu0 0.0
      %1058 = vmatmul.mubr.f32.gmra.mxu0 %v931
      %v1059 = vpop.f32.mrf.mxu0
      %v1060 = vadd.f32 %v909, %v1059
      %v1061 = vpop.f32.mrf.mxu0
      %1062 = vmatprep.mubr.f32.mxu0 0.0
      %1063 = vmatmul.mubr.f32.gmra.mxu0 %v934
      %v1064 = vpop.f32.mrf.mxu0
      %v1065 = vadd.f32 %v909, %v1064
      %v1066 = vpop.f32.mrf.mxu0
      %1067 = vmatprep.mubr.f32.mxu0 0.0
      %1068 = vmatmul.mubr.f32.gmra.mxu0 %v937
      %v1069 = vpop.f32.mrf.mxu0
      %v1070 = vadd.f32 %v909, %v1069
      %v1071 = vpop.f32.mrf.mxu0
      %1072 = vmatprep.mubr.f32.mxu0 0.0
      %1073 = vmatmul.mubr.f32.gmra.mxu0 %v940
      %v1074 = vpop.f32.mrf.mxu0
      %v1075 = vadd.f32 %v909, %v1074
      %v1076 = vpop.f32.mrf.mxu0
      %1077 = vmatprep.mubr.f32.mxu0 0.0
      %1078 = vmatmul.mubr.f32.gmra.mxu0 %v943
      %v1079 = vpop.f32.mrf.mxu0
      %v1080 = vadd.f32 %v909, %v1079
      %v1081 = vpop.f32.mrf.mxu0
      %1082 = vmatprep.mubr.f32.mxu0 0.0
      %1083 = vmatmul.mubr.f32.gmra.mxu0 %v946
      %v1084 = vpop.f32.mrf.mxu0
      %v1085 = vadd.f32 %v909, %v1084
      %v1086 = vpop.f32.mrf.mxu0
      %1087 = vmatprep.mubr.f32.mxu0 0.0
      %1088 = vmatmul.mubr.f32.gmra.mxu0 %v949
      %v1089 = vpop.f32.mrf.mxu0
      %v1090 = vadd.f32 %v909, %v1089
      %v1091 = vpop.f32.mrf.mxu0
      %1092 = vmatprep.mubr.f32.mxu0 0.0
      %1093 = vmatmul.mubr.f32.gmra.mxu0 %v952
      %v1094 = vpop.f32.mrf.mxu0
      %v1095 = vadd.f32 %v909, %v1094
      %v1096 = vpop.f32.mrf.mxu0
      %1097 = vmatprep.mubr.f32.mxu0 0.0
      %1098 = vmatmul.mubr.f32.gmra.mxu0 %v955
      %v1099 = vpop.f32.mrf.mxu0
      %v1100 = vadd.f32 %v909, %v1099
      %v1101 = vpop.f32.mrf.mxu0
      %1102 = vmatprep.mubr.f32.mxu0 0.0
      %1103 = vmatmul.mubr.f32.gmra.mxu0 %v958
      %v1104 = vpop.f32.mrf.mxu0
      %v1105 = vadd.f32 %v909, %v1104
      %v1106 = vpop.f32.mrf.mxu0
      %1107 = vdwg.mxu0
      %vm1108 = vcmask 15360
      %v1110 = vsel %vm1108, %v649, 0
      %v1113 = vsel %vm1108, %v654, 0
      %v1116 = vsel %vm1108, %v659, 0
      %v1119 = vsel %vm1108, %v664, 0
      %v1122 = vsel %vm1108, %v669, 0
      %v1125 = vsel %vm1108, %v674, 0
      %v1128 = vsel %vm1108, %v679, 0
      %v1131 = vsel %vm1108, %v684, 0
      %v1134 = vsel %vm1108, %v689, 0
      %v1137 = vsel %vm1108, %v694, 0
      %v1140 = vsel %vm1108, %v699, 0
      %v1143 = vsel %vm1108, %v704, 0
      %v1146 = vsel %vm1108, %v709, 0
      %v1149 = vsel %vm1108, %v714, 0
      %v1152 = vsel %vm1108, %v719, 0
      %v1155 = vsel %vm1108, %v724, 0
      %v1158 = vsel %vm1108, %v809, 0
      %v1161 = vsel %vm1108, %v814, 0
      %v1164 = vsel %vm1108, %v819, 0
      %v1167 = vsel %vm1108, %v824, 0
      %v1170 = vsel %vm1108, %v829, 0
      %v1173 = vsel %vm1108, %v834, 0
      %v1176 = vsel %vm1108, %v839, 0
      %v1179 = vsel %vm1108, %v844, 0
      %1181 = vmatprep.subr.mxu0 0.0
      %1182 = vmatpush1.xpose.msra.mxu0 0.0
      %1183 = vmatprep.subr.mxu0 0.0
      %1184 = vmatpush1.xpose.msra.mxu0 0.0
      %1185 = vmatprep.subr.mxu0 0.0
      %1186 = vmatpush1.xpose.msra.mxu0 0.0
      %1187 = vmatprep.subr.mxu0 0.0
      %1188 = vmatpush1.xpose.msra.mxu0 0.0
      %1189 = vmatprep.subr.mxu0 0.0
      %1190 = vmatpush1.xpose.msra.mxu0 0.0
      %1191 = vmatprep.subr.mxu0 0.0
      %1192 = vmatpush1.xpose.msra.mxu0 0.0
      %1193 = vmatprep.subr.mxu0 0.0
      %1194 = vmatpush1.xpose.msra.mxu0 0.0
      %1195 = vmatprep.subr.mxu0 0.0
      %1196 = vmatpush1.xpose.msra.mxu0 0.0
      %1197 = vmatprep.subr.mxu0 0.0
      %1198 = vmatpush1.xpose.msra.mxu0 %v1179
      %1199 = vmatprep.subr.mxu0 0.0
      %1200 = vmatpush1.xpose.msra.mxu0 %v1176
      %1201 = vmatprep.subr.mxu0 0.0
      %1202 = vmatpush1.xpose.msra.mxu0 %v1173
      %1203 = vmatprep.subr.mxu0 0.0
      %1204 = vmatpush1.xpose.msra.mxu0 %v1170
      %1205 = vmatprep.subr.mxu0 0.0
      %1206 = vmatpush1.xpose.msra.mxu0 %v1167
      %1207 = vmatprep.subr.mxu0 0.0
      %1208 = vmatpush1.xpose.msra.mxu0 %v1164
      %1209 = vmatprep.subr.mxu0 0.0
      %1210 = vmatpush1.xpose.msra.mxu0 %v1161
      %1211 = vmatprep.subr.mxu0 0.0
      %1212 = vmatpush1.xpose.msra.mxu0 %v1158
      %1213 = vmatprep.subr.mxu0 0.0
      %1214 = vmatpush2.xpose.msra.mxu0 0.0
      %1215 = vmatprep.subr.mxu0 0.0
      %1216 = vmatpush2.xpose.msra.mxu0 0.0
      %1217 = vmatprep.subr.mxu0 0.0
      %1218 = vmatpush2.xpose.msra.mxu0 0.0
      %1219 = vmatprep.subr.mxu0 0.0
      %1220 = vmatpush2.xpose.msra.mxu0 0.0
      %1221 = vmatprep.subr.mxu0 0.0
      %1222 = vmatpush2.xpose.msra.mxu0 0.0
      %1223 = vmatprep.subr.mxu0 0.0
      %1224 = vmatpush2.xpose.msra.mxu0 0.0
      %1225 = vmatprep.subr.mxu0 0.0
      %1226 = vmatpush2.xpose.msra.mxu0 0.0
      %1227 = vmatprep.subr.mxu0 0.0
      %1228 = vmatpush2.xpose.msra.mxu0 0.0
      %1229 = vmatprep.subr.mxu0 0.0
      %1230 = vmatpush2.xpose.msra.mxu0 0.0
      %1231 = vmatprep.subr.mxu0 0.0
      %1232 = vmatpush2.xpose.msra.mxu0 0.0
      %1233 = vmatprep.subr.mxu0 0.0
      %1234 = vmatpush2.xpose.msra.mxu0 0.0
      %1235 = vmatprep.subr.mxu0 0.0
      %1236 = vmatpush2.xpose.msra.mxu0 0.0
      %1237 = vmatprep.subr.mxu0 0.0
      %1238 = vmatpush2.xpose.msra.mxu0 0.0
      %1239 = vmatprep.subr.mxu0 0.0
      %1240 = vmatpush2.xpose.msra.mxu0 0.0
      %1241 = vmatprep.subr.mxu0 0.0
      %1242 = vmatpush2.xpose.msra.mxu0 0.0
      %1243 = vmatprep.subr.mxu0 0.0
      %1244 = vmatpush2.xpose.msra.mxu0 0.0
      %1245 = vmatprep.mubr.f32.mxu0 0.0
      %1246 = vmatmul.mubr.f32.gmra.mxu0 %v1110
      %v1247 = vpop.f32.mrf.mxu0
      %v1248 = vadd.f32 0.0, %v1247
      %v1249 = vpop.f32.mrf.mxu0
      %1250 = vmatprep.mubr.f32.mxu0 0.0
      %1251 = vmatmul.mubr.f32.gmra.mxu0 %v1113
      %v1252 = vpop.f32.mrf.mxu0
      %v1253 = vadd.f32 0.0, %v1252
      %v1254 = vpop.f32.mrf.mxu0
      %1255 = vmatprep.mubr.f32.mxu0 0.0
      %1256 = vmatmul.mubr.f32.gmra.mxu0 %v1116
      %v1257 = vpop.f32.mrf.mxu0
      %v1258 = vadd.f32 0.0, %v1257
      %v1259 = vpop.f32.mrf.mxu0
      %1260 = vmatprep.mubr.f32.mxu0 0.0
      %1261 = vmatmul.mubr.f32.gmra.mxu0 %v1119
      %v1262 = vpop.f32.mrf.mxu0
      %v1263 = vadd.f32 0.0, %v1262
      %v1264 = vpop.f32.mrf.mxu0
      %1265 = vmatprep.mubr.f32.mxu0 0.0
      %1266 = vmatmul.mubr.f32.gmra.mxu0 %v1122
      %v1267 = vpop.f32.mrf.mxu0
      %v1268 = vadd.f32 0.0, %v1267
      %v1269 = vpop.f32.mrf.mxu0
      %1270 = vmatprep.mubr.f32.mxu0 0.0
      %1271 = vmatmul.mubr.f32.gmra.mxu0 %v1125
      %v1272 = vpop.f32.mrf.mxu0
      %v1273 = vadd.f32 0.0, %v1272
      %v1274 = vpop.f32.mrf.mxu0
      %1275 = vmatprep.mubr.f32.mxu0 0.0
      %1276 = vmatmul.mubr.f32.gmra.mxu0 %v1128
      %v1277 = vpop.f32.mrf.mxu0
      %v1278 = vadd.f32 0.0, %v1277
      %v1279 = vpop.f32.mrf.mxu0
      %1280 = vmatprep.mubr.f32.mxu0 0.0
      %1281 = vmatmul.mubr.f32.gmra.mxu0 %v1131
      %v1282 = vpop.f32.mrf.mxu0
      %v1283 = vadd.f32 0.0, %v1282
      %v1284 = vpop.f32.mrf.mxu0
      %1285 = vmatprep.mubr.f32.mxu0 0.0
      %1286 = vmatmul.mubr.f32.gmra.mxu0 %v1134
      %v1287 = vpop.f32.mrf.mxu0
      %v1288 = vadd.f32 0.0, %v1287
      %v1289 = vpop.f32.mrf.mxu0
      %1290 = vmatprep.mubr.f32.mxu0 0.0
      %1291 = vmatmul.mubr.f32.gmra.mxu0 %v1137
      %v1292 = vpop.f32.mrf.mxu0
      %v1293 = vadd.f32 0.0, %v1292
      %v1294 = vpop.f32.mrf.mxu0
      %1295 = vmatprep.mubr.f32.mxu0 0.0
      %1296 = vmatmul.mubr.f32.gmra.mxu0 %v1140
      %v1297 = vpop.f32.mrf.mxu0
      %v1298 = vadd.f32 0.0, %v1297
      %v1299 = vpop.f32.mrf.mxu0
      %1300 = vmatprep.mubr.f32.mxu0 0.0
      %1301 = vmatmul.mubr.f32.gmra.mxu0 %v1143
      %v1302 = vpop.f32.mrf.mxu0
      %v1303 = vadd.f32 0.0, %v1302
      %v1304 = vpop.f32.mrf.mxu0
      %1305 = vmatprep.mubr.f32.mxu0 0.0
      %1306 = vmatmul.mubr.f32.gmra.mxu0 %v1146
      %v1307 = vpop.f32.mrf.mxu0
      %v1308 = vadd.f32 0.0, %v1307
      %v1309 = vpop.f32.mrf.mxu0
      %1310 = vmatprep.mubr.f32.mxu0 0.0
      %1311 = vmatmul.mubr.f32.gmra.mxu0 %v1149
      %v1312 = vpop.f32.mrf.mxu0
      %v1313 = vadd.f32 0.0, %v1312
      %v1314 = vpop.f32.mrf.mxu0
      %1315 = vmatprep.mubr.f32.mxu0 0.0
      %1316 = vmatmul.mubr.f32.gmra.mxu0 %v1152
      %v1317 = vpop.f32.mrf.mxu0
      %v1318 = vadd.f32 0.0, %v1317
      %v1319 = vpop.f32.mrf.mxu0
      %1320 = vmatprep.mubr.f32.mxu0 0.0
      %1321 = vmatmul.mubr.f32.gmra.mxu0 %v1155
      %v1322 = vpop.f32.mrf.mxu0
      %v1323 = vadd.f32 0.0, %v1322
      %v1324 = vpop.f32.mrf.mxu0
      %1325 = vdwg.mxu0
      %v1327 = vsel %vm1108, %v729, 0
      %v1330 = vsel %vm1108, %v734, 0
      %v1333 = vsel %vm1108, %v739, 0
      %v1336 = vsel %vm1108, %v744, 0
      %v1339 = vsel %vm1108, %v749, 0
      %v1342 = vsel %vm1108, %v754, 0
      %v1345 = vsel %vm1108, %v759, 0
      %v1348 = vsel %vm1108, %v764, 0
      %v1351 = vsel %vm1108, %v769, 0
      %v1354 = vsel %vm1108, %v774, 0
      %v1357 = vsel %vm1108, %v779, 0
      %v1360 = vsel %vm1108, %v784, 0
      %v1363 = vsel %vm1108, %v789, 0
      %v1366 = vsel %vm1108, %v794, 0
      %v1369 = vsel %vm1108, %v799, 0
      %v1372 = vsel %vm1108, %v804, 0
      %v1375 = vsel %vm1108, %v849, 0
      %v1378 = vsel %vm1108, %v854, 0
      %v1381 = vsel %vm1108, %v859, 0
      %v1384 = vsel %vm1108, %v864, 0
      %v1387 = vsel %vm1108, %v869, 0
      %v1390 = vsel %vm1108, %v874, 0
      %v1393 = vsel %vm1108, %v879, 0
      %v1396 = vsel %vm1108, %v884, 0
      %1398 = vmatprep.subr.mxu0 0.0
      %1399 = vmatpush1.xpose.msra.mxu0 0.0
      %1400 = vmatprep.subr.mxu0 0.0
      %1401 = vmatpush1.xpose.msra.mxu0 0.0
      %1402 = vmatprep.subr.mxu0 0.0
      %1403 = vmatpush1.xpose.msra.mxu0 0.0
      %1404 = vmatprep.subr.mxu0 0.0
      %1405 = vmatpush1.xpose.msra.mxu0 0.0
      %1406 = vmatprep.subr.mxu0 0.0
      %1407 = vmatpush1.xpose.msra.mxu0 0.0
      %1408 = vmatprep.subr.mxu0 0.0
      %1409 = vmatpush1.xpose.msra.mxu0 0.0
      %1410 = vmatprep.subr.mxu0 0.0
      %1411 = vmatpush1.xpose.msra.mxu0 0.0
      %1412 = vmatprep.subr.mxu0 0.0
      %1413 = vmatpush1.xpose.msra.mxu0 0.0
      %1414 = vmatprep.subr.mxu0 0.0
      %1415 = vmatpush1.xpose.msra.mxu0 %v1396
      %1416 = vmatprep.subr.mxu0 0.0
      %1417 = vmatpush1.xpose.msra.mxu0 %v1393
      %1418 = vmatprep.subr.mxu0 0.0
      %1419 = vmatpush1.xpose.msra.mxu0 %v1390
      %1420 = vmatprep.subr.mxu0 0.0
      %1421 = vmatpush1.xpose.msra.mxu0 %v1387
      %1422 = vmatprep.subr.mxu0 0.0
      %1423 = vmatpush1.xpose.msra.mxu0 %v1384
      %1424 = vmatprep.subr.mxu0 0.0
      %1425 = vmatpush1.xpose.msra.mxu0 %v1381
      %1426 = vmatprep.subr.mxu0 0.0
      %1427 = vmatpush1.xpose.msra.mxu0 %v1378
      %1428 = vmatprep.subr.mxu0 0.0
      %1429 = vmatpush1.xpose.msra.mxu0 %v1375
      %1430 = vmatprep.subr.mxu0 0.0
      %1431 = vmatpush2.xpose.msra.mxu0 0.0
      %1432 = vmatprep.subr.mxu0 0.0
      %1433 = vmatpush2.xpose.msra.mxu0 0.0
      %1434 = vmatprep.subr.mxu0 0.0
      %1435 = vmatpush2.xpose.msra.mxu0 0.0
      %1436 = vmatprep.subr.mxu0 0.0
      %1437 = vmatpush2.xpose.msra.mxu0 0.0
      %1438 = vmatprep.subr.mxu0 0.0
      %1439 = vmatpush2.xpose.msra.mxu0 0.0
      %1440 = vmatprep.subr.mxu0 0.0
      %1441 = vmatpush2.xpose.msra.mxu0 0.0
      %1442 = vmatprep.subr.mxu0 0.0
      %1443 = vmatpush2.xpose.msra.mxu0 0.0
      %1444 = vmatprep.subr.mxu0 0.0
      %1445 = vmatpush2.xpose.msra.mxu0 0.0
      %1446 = vmatprep.subr.mxu0 0.0
      %1447 = vmatpush2.xpose.msra.mxu0 0.0
      %1448 = vmatprep.subr.mxu0 0.0
      %1449 = vmatpush2.xpose.msra.mxu0 0.0
      %1450 = vmatprep.subr.mxu0 0.0
      %1451 = vmatpush2.xpose.msra.mxu0 0.0
      %1452 = vmatprep.subr.mxu0 0.0
      %1453 = vmatpush2.xpose.msra.mxu0 0.0
      %1454 = vmatprep.subr.mxu0 0.0
      %1455 = vmatpush2.xpose.msra.mxu0 0.0
      %1456 = vmatprep.subr.mxu0 0.0
      %1457 = vmatpush2.xpose.msra.mxu0 0.0
      %1458 = vmatprep.subr.mxu0 0.0
      %1459 = vmatpush2.xpose.msra.mxu0 0.0
      %1460 = vmatprep.subr.mxu0 0.0
      %1461 = vmatpush2.xpose.msra.mxu0 0.0
      %1462 = vmatprep.mubr.f32.mxu0 0.0
      %1463 = vmatmul.mubr.f32.gmra.mxu0 %v1327
      %v1464 = vpop.f32.mrf.mxu0
      %v1465 = vadd.f32 0.0, %v1464
      %v1466 = vpop.f32.mrf.mxu0
      %1467 = vmatprep.mubr.f32.mxu0 0.0
      %1468 = vmatmul.mubr.f32.gmra.mxu0 %v1330
      %v1469 = vpop.f32.mrf.mxu0
      %v1470 = vadd.f32 0.0, %v1469
      %v1471 = vpop.f32.mrf.mxu0
      %1472 = vmatprep.mubr.f32.mxu0 0.0
      %1473 = vmatmul.mubr.f32.gmra.mxu0 %v1333
      %v1474 = vpop.f32.mrf.mxu0
      %v1475 = vadd.f32 0.0, %v1474
      %v1476 = vpop.f32.mrf.mxu0
      %1477 = vmatprep.mubr.f32.mxu0 0.0
      %1478 = vmatmul.mubr.f32.gmra.mxu0 %v1336
      %v1479 = vpop.f32.mrf.mxu0
      %v1480 = vadd.f32 0.0, %v1479
      %v1481 = vpop.f32.mrf.mxu0
      %1482 = vmatprep.mubr.f32.mxu0 0.0
      %1483 = vmatmul.mubr.f32.gmra.mxu0 %v1339
      %v1484 = vpop.f32.mrf.mxu0
      %v1485 = vadd.f32 0.0, %v1484
      %v1486 = vpop.f32.mrf.mxu0
      %1487 = vmatprep.mubr.f32.mxu0 0.0
      %1488 = vmatmul.mubr.f32.gmra.mxu0 %v1342
      %v1489 = vpop.f32.mrf.mxu0
      %v1490 = vadd.f32 0.0, %v1489
      %v1491 = vpop.f32.mrf.mxu0
      %1492 = vmatprep.mubr.f32.mxu0 0.0
      %1493 = vmatmul.mubr.f32.gmra.mxu0 %v1345
      %v1494 = vpop.f32.mrf.mxu0
      %v1495 = vadd.f32 0.0, %v1494
      %v1496 = vpop.f32.mrf.mxu0
      %1497 = vmatprep.mubr.f32.mxu0 0.0
      %1498 = vmatmul.mubr.f32.gmra.mxu0 %v1348
      %v1499 = vpop.f32.mrf.mxu0
      %v1500 = vadd.f32 0.0, %v1499
      %v1501 = vpop.f32.mrf.mxu0
      %1502 = vmatprep.mubr.f32.mxu0 0.0
      %1503 = vmatmul.mubr.f32.gmra.mxu0 %v1351
      %v1504 = vpop.f32.mrf.mxu0
      %v1505 = vadd.f32 0.0, %v1504
      %v1506 = vpop.f32.mrf.mxu0
      %1507 = vmatprep.mubr.f32.mxu0 0.0
      %1508 = vmatmul.mubr.f32.gmra.mxu0 %v1354
      %v1509 = vpop.f32.mrf.mxu0
      %v1510 = vadd.f32 0.0, %v1509
      %v1511 = vpop.f32.mrf.mxu0
      %1512 = vmatprep.mubr.f32.mxu0 0.0
      %1513 = vmatmul.mubr.f32.gmra.mxu0 %v1357
      %v1514 = vpop.f32.mrf.mxu0
      %v1515 = vadd.f32 0.0, %v1514
      %v1516 = vpop.f32.mrf.mxu0
      %1517 = vmatprep.mubr.f32.mxu0 0.0
      %1518 = vmatmul.mubr.f32.gmra.mxu0 %v1360
      %v1519 = vpop.f32.mrf.mxu0
      %v1520 = vadd.f32 0.0, %v1519
      %v1521 = vpop.f32.mrf.mxu0
      %1522 = vmatprep.mubr.f32.mxu0 0.0
      %1523 = vmatmul.mubr.f32.gmra.mxu0 %v1363
      %v1524 = vpop.f32.mrf.mxu0
      %v1525 = vadd.f32 0.0, %v1524
      %v1526 = vpop.f32.mrf.mxu0
      %1527 = vmatprep.mubr.f32.mxu0 0.0
      %1528 = vmatmul.mubr.f32.gmra.mxu0 %v1366
      %v1529 = vpop.f32.mrf.mxu0
      %v1530 = vadd.f32 0.0, %v1529
      %v1531 = vpop.f32.mrf.mxu0
      %1532 = vmatprep.mubr.f32.mxu0 0.0
      %1533 = vmatmul.mubr.f32.gmra.mxu0 %v1369
      %v1534 = vpop.f32.mrf.mxu0
      %v1535 = vadd.f32 0.0, %v1534
      %v1536 = vpop.f32.mrf.mxu0
      %1537 = vmatprep.mubr.f32.mxu0 0.0
      %1538 = vmatmul.mubr.f32.gmra.mxu0 %v1372
      %v1539 = vpop.f32.mrf.mxu0
      %v1540 = vadd.f32 0.0, %v1539
      %v1541 = vpop.f32.mrf.mxu0
      %1542 = vdwg.mxu0
      %vm1543 = vcmask 523264
      %v1544 = vsel %vm1543, %v1248, -inf
      %1545 = vmax.xlane.f32.xlu0 %v1544
      %v1546 = vpop.xlane.xlu0 %1545
      %v1547 = vsel %vm1543, %v1253, -inf
      %1548 = vmax.xlane.f32.xlu0 %v1547
      %v1549 = vpop.xlane.xlu0 %1548
      %v1550 = vsel %vm1543, %v1258, -inf
      %1551 = vmax.xlane.f32.xlu0 %v1550
      %v1552 = vpop.xlane.xlu0 %1551
      %v1553 = vsel %vm1543, %v1263, -inf
      %1554 = vmax.xlane.f32.xlu0 %v1553
      %v1555 = vpop.xlane.xlu0 %1554
      %v1556 = vsel %vm1543, %v1268, -inf
      %1557 = vmax.xlane.f32.xlu0 %v1556
      %v1558 = vpop.xlane.xlu0 %1557
      %v1559 = vsel %vm1543, %v1273, -inf
      %1560 = vmax.xlane.f32.xlu0 %v1559
      %v1561 = vpop.xlane.xlu0 %1560
      %v1562 = vsel %vm1543, %v1278, -inf
      %1563 = vmax.xlane.f32.xlu0 %v1562
      %v1564 = vpop.xlane.xlu0 %1563
      %v1565 = vsel %vm1543, %v1283, -inf
      %1566 = vmax.xlane.f32.xlu0 %v1565
      %v1567 = vpop.xlane.xlu0 %1566
      %v1568 = vsel %vm1543, %v1288, -inf
      %1569 = vmax.xlane.f32.xlu0 %v1568
      %v1570 = vpop.xlane.xlu0 %1569
      %v1571 = vsel %vm1543, %v1293, -inf
      %1572 = vmax.xlane.f32.xlu0 %v1571
      %v1573 = vpop.xlane.xlu0 %1572
      %v1574 = vsel %vm1543, %v1298, -inf
      %1575 = vmax.xlane.f32.xlu0 %v1574
      %v1576 = vpop.xlane.xlu0 %1575
      %v1577 = vsel %vm1543, %v1303, -inf
      %1578 = vmax.xlane.f32.xlu0 %v1577
      %v1579 = vpop.xlane.xlu0 %1578
      %v1580 = vsel %vm1543, %v1308, -inf
      %1581 = vmax.xlane.f32.xlu0 %v1580
      %v1582 = vpop.xlane.xlu0 %1581
      %v1583 = vsel %vm1543, %v1313, -inf
      %1584 = vmax.xlane.f32.xlu0 %v1583
      %v1585 = vpop.xlane.xlu0 %1584
      %v1586 = vsel %vm1543, %v1318, -inf
      %1587 = vmax.xlane.f32.xlu0 %v1586
      %v1588 = vpop.xlane.xlu0 %1587
      %v1589 = vsel %vm1543, %v1323, -inf
      %1590 = vmax.xlane.f32.xlu0 %v1589
      %v1591 = vpop.xlane.xlu0 %1590
      %v1592 = vsel %vm1543, %v1465, -inf
      %1593 = vmax.xlane.f32.xlu0 %v1592
      %v1594 = vpop.xlane.xlu0 %1593
      %v1595 = vsel %vm1543, %v1470, -inf
      %1596 = vmax.xlane.f32.xlu0 %v1595
      %v1597 = vpop.xlane.xlu0 %1596
      %v1598 = vsel %vm1543, %v1475, -inf
      %1599 = vmax.xlane.f32.xlu0 %v1598
      %v1600 = vpop.xlane.xlu0 %1599
      %v1601 = vsel %vm1543, %v1480, -inf
      %1602 = vmax.xlane.f32.xlu0 %v1601
      %v1603 = vpop.xlane.xlu0 %1602
      %v1604 = vsel %vm1543, %v1485, -inf
      %1605 = vmax.xlane.f32.xlu0 %v1604
      %v1606 = vpop.xlane.xlu0 %1605
      %v1607 = vsel %vm1543, %v1490, -inf
      %1608 = vmax.xlane.f32.xlu0 %v1607
      %v1609 = vpop.xlane.xlu0 %1608
      %v1610 = vsel %vm1543, %v1495, -inf
      %1611 = vmax.xlane.f32.xlu0 %v1610
      %v1612 = vpop.xlane.xlu0 %1611
      %v1613 = vsel %vm1543, %v1500, -inf
      %1614 = vmax.xlane.f32.xlu0 %v1613
      %v1615 = vpop.xlane.xlu0 %1614
      %v1616 = vsel %vm1543, %v1505, -inf
      %1617 = vmax.xlane.f32.xlu0 %v1616
      %v1618 = vpop.xlane.xlu0 %1617
      %v1619 = vsel %vm1543, %v1510, -inf
      %1620 = vmax.xlane.f32.xlu0 %v1619
      %v1621 = vpop.xlane.xlu0 %1620
      %v1622 = vsel %vm1543, %v1515, -inf
      %1623 = vmax.xlane.f32.xlu0 %v1622
      %v1624 = vpop.xlane.xlu0 %1623
      %v1625 = vsel %vm1543, %v1520, -inf
      %1626 = vmax.xlane.f32.xlu0 %v1625
      %v1627 = vpop.xlane.xlu0 %1626
      %v1628 = vsel %vm1543, %v1525, -inf
      %1629 = vmax.xlane.f32.xlu0 %v1628
      %v1630 = vpop.xlane.xlu0 %1629
      %v1631 = vsel %vm1543, %v1530, -inf
      %1632 = vmax.xlane.f32.xlu0 %v1631
      %v1633 = vpop.xlane.xlu0 %1632
      %v1634 = vsel %vm1543, %v1535, -inf
      %1635 = vmax.xlane.f32.xlu0 %v1634
      %v1636 = vpop.xlane.xlu0 %1635
      %v1637 = vsel %vm1543, %v1540, -inf
      %1638 = vmax.xlane.f32.xlu0 %v1637
      %v1639 = vpop.xlane.xlu0 %1638
      %v1640 = vsub.f32 %v1248, %v1546
      %v1641 = vsub.f32 %v1253, %v1549
      %v1642 = vsub.f32 %v1258, %v1552
      %v1643 = vsub.f32 %v1263, %v1555
      %v1644 = vsub.f32 %v1268, %v1558
      %v1645 = vsub.f32 %v1273, %v1561
      %v1646 = vsub.f32 %v1278, %v1564
      %v1647 = vsub.f32 %v1283, %v1567
      %v1648 = vsub.f32 %v1288, %v1570
      %v1649 = vsub.f32 %v1293, %v1573
      %v1650 = vsub.f32 %v1298, %v1576
      %v1651 = vsub.f32 %v1303, %v1579
      %v1652 = vsub.f32 %v1308, %v1582
      %v1653 = vsub.f32 %v1313, %v1585
      %v1654 = vsub.f32 %v1318, %v1588
      %v1655 = vsub.f32 %v1323, %v1591
      %v1656 = vsub.f32 %v1465, %v1594
      %v1657 = vsub.f32 %v1470, %v1597
      %v1658 = vsub.f32 %v1475, %v1600
      %v1659 = vsub.f32 %v1480, %v1603
      %v1660 = vsub.f32 %v1485, %v1606
      %v1661 = vsub.f32 %v1490, %v1609
      %v1662 = vsub.f32 %v1495, %v1612
      %v1663 = vsub.f32 %v1500, %v1615
      %v1664 = vsub.f32 %v1505, %v1618
      %v1665 = vsub.f32 %v1510, %v1621
      %v1666 = vsub.f32 %v1515, %v1624
      %v1667 = vsub.f32 %v1520, %v1627
      %v1668 = vsub.f32 %v1525, %v1630
      %v1669 = vsub.f32 %v1530, %v1633
      %v1670 = vsub.f32 %v1535, %v1636
      %v1671 = vsub.f32 %v1540, %v1639
      %v1672 = vmul.f32 %v1640, 1.442695
      %v1673 = vpow.pop %v1672
      %v1674 = vmul.f32 %v1641, 1.442695
      %v1675 = vpow.pop %v1674
      %v1676 = vmul.f32 %v1642, 1.442695
      %v1677 = vpow.pop %v1676
      %v1678 = vmul.f32 %v1643, 1.442695
      %v1679 = vpow.pop %v1678
      %v1680 = vmul.f32 %v1644, 1.442695
      %v1681 = vpow.pop %v1680
      %v1682 = vmul.f32 %v1645, 1.442695
      %v1683 = vpow.pop %v1682
      %v1684 = vmul.f32 %v1646, 1.442695
      %v1685 = vpow.pop %v1684
      %v1686 = vmul.f32 %v1647, 1.442695
      %v1687 = vpow.pop %v1686
      %v1688 = vmul.f32 %v1648, 1.442695
      %v1689 = vpow.pop %v1688
      %v1690 = vmul.f32 %v1649, 1.442695
      %v1691 = vpow.pop %v1690
      %v1692 = vmul.f32 %v1650, 1.442695
      %v1693 = vpow.pop %v1692
      %v1694 = vmul.f32 %v1651, 1.442695
      %v1695 = vpow.pop %v1694
      %v1696 = vmul.f32 %v1652, 1.442695
      %v1697 = vpow.pop %v1696
      %v1698 = vmul.f32 %v1653, 1.442695
      %v1699 = vpow.pop %v1698
      %v1700 = vmul.f32 %v1654, 1.442695
      %v1701 = vpow.pop %v1700
      %v1702 = vmul.f32 %v1655, 1.442695
      %v1703 = vpow.pop %v1702
      %v1704 = vmul.f32 %v1656, 1.442695
      %v1705 = vpow.pop %v1704
      %v1706 = vmul.f32 %v1657, 1.442695
      %v1707 = vpow.pop %v1706
      %v1708 = vmul.f32 %v1658, 1.442695
      %v1709 = vpow.pop %v1708
      %v1710 = vmul.f32 %v1659, 1.442695
      %v1711 = vpow.pop %v1710
      %v1712 = vmul.f32 %v1660, 1.442695
      %v1713 = vpow.pop %v1712
      %v1714 = vmul.f32 %v1661, 1.442695
      %v1715 = vpow.pop %v1714
      %v1716 = vmul.f32 %v1662, 1.442695
      %v1717 = vpow.pop %v1716
      %v1718 = vmul.f32 %v1663, 1.442695
      %v1719 = vpow.pop %v1718
      %v1720 = vmul.f32 %v1664, 1.442695
      %v1721 = vpow.pop %v1720
      %v1722 = vmul.f32 %v1665, 1.442695
      %v1723 = vpow.pop %v1722
      %v1724 = vmul.f32 %v1666, 1.442695
      %v1725 = vpow.pop %v1724
      %v1726 = vmul.f32 %v1667, 1.442695
      %v1727 = vpow.pop %v1726
      %v1728 = vmul.f32 %v1668, 1.442695
      %v1729 = vpow.pop %v1728
      %v1730 = vmul.f32 %v1669, 1.442695
      %v1731 = vpow.pop %v1730
      %v1732 = vmul.f32 %v1670, 1.442695
      %v1733 = vpow.pop %v1732
      %v1734 = vmul.f32 %v1671, 1.442695
      %v1735 = vpow.pop %v1734
      %v1736 = vsel %vm1543, %v1673, 0.0
      %1737 = vadd.xlane.f32.xlu0 %v1736
      %v1738 = vpop.xlane.xlu0 %1737
      %v1739 = vsel %vm1543, %v1675, 0.0
      %1740 = vadd.xlane.f32.xlu0 %v1739
      %v1741 = vpop.xlane.xlu0 %1740
      %v1742 = vsel %vm1543, %v1677, 0.0
      %1743 = vadd.xlane.f32.xlu0 %v1742
      %v1744 = vpop.xlane.xlu0 %1743
      %v1745 = vsel %vm1543, %v1679, 0.0
      %1746 = vadd.xlane.f32.xlu0 %v1745
      %v1747 = vpop.xlane.xlu0 %1746
      %v1748 = vsel %vm1543, %v1681, 0.0
      %1749 = vadd.xlane.f32.xlu0 %v1748
      %v1750 = vpop.xlane.xlu0 %1749
      %v1751 = vsel %vm1543, %v1683, 0.0
      %1752 = vadd.xlane.f32.xlu0 %v1751
      %v1753 = vpop.xlane.xlu0 %1752
      %v1754 = vsel %vm1543, %v1685, 0.0
      %1755 = vadd.xlane.f32.xlu0 %v1754
      %v1756 = vpop.xlane.xlu0 %1755
      %v1757 = vsel %vm1543, %v1687, 0.0
      %1758 = vadd.xlane.f32.xlu0 %v1757
      %v1759 = vpop.xlane.xlu0 %1758
      %v1760 = vsel %vm1543, %v1689, 0.0
      %1761 = vadd.xlane.f32.xlu0 %v1760
      %v1762 = vpop.xlane.xlu0 %1761
      %v1763 = vsel %vm1543, %v1691, 0.0
      %1764 = vadd.xlane.f32.xlu0 %v1763
      %v1765 = vpop.xlane.xlu0 %1764
      %v1766 = vsel %vm1543, %v1693, 0.0
      %1767 = vadd.xlane.f32.xlu0 %v1766
      %v1768 = vpop.xlane.xlu0 %1767
      %v1769 = vsel %vm1543, %v1695, 0.0
      %1770 = vadd.xlane.f32.xlu0 %v1769
      %v1771 = vpop.xlane.xlu0 %1770
      %v1772 = vsel %vm1543, %v1697, 0.0
      %1773 = vadd.xlane.f32.xlu0 %v1772
      %v1774 = vpop.xlane.xlu0 %1773
      %v1775 = vsel %vm1543, %v1699, 0.0
      %1776 = vadd.xlane.f32.xlu0 %v1775
      %v1777 = vpop.xlane.xlu0 %1776
      %v1778 = vsel %vm1543, %v1701, 0.0
      %1779 = vadd.xlane.f32.xlu0 %v1778
      %v1780 = vpop.xlane.xlu0 %1779
      %v1781 = vsel %vm1543, %v1703, 0.0
      %1782 = vadd.xlane.f32.xlu0 %v1781
      %v1783 = vpop.xlane.xlu0 %1782
      %v1784 = vsel %vm1543, %v1705, 0.0
      %1785 = vadd.xlane.f32.xlu0 %v1784
      %v1786 = vpop.xlane.xlu0 %1785
      %v1787 = vsel %vm1543, %v1707, 0.0
      %1788 = vadd.xlane.f32.xlu0 %v1787
      %v1789 = vpop.xlane.xlu0 %1788
      %v1790 = vsel %vm1543, %v1709, 0.0
      %1791 = vadd.xlane.f32.xlu0 %v1790
      %v1792 = vpop.xlane.xlu0 %1791
      %v1793 = vsel %vm1543, %v1711, 0.0
      %1794 = vadd.xlane.f32.xlu0 %v1793
      %v1795 = vpop.xlane.xlu0 %1794
      %v1796 = vsel %vm1543, %v1713, 0.0
      %1797 = vadd.xlane.f32.xlu0 %v1796
      %v1798 = vpop.xlane.xlu0 %1797
      %v1799 = vsel %vm1543, %v1715, 0.0
      %1800 = vadd.xlane.f32.xlu0 %v1799
      %v1801 = vpop.xlane.xlu0 %1800
      %v1802 = vsel %vm1543, %v1717, 0.0
      %1803 = vadd.xlane.f32.xlu0 %v1802
      %v1804 = vpop.xlane.xlu0 %1803
      %v1805 = vsel %vm1543, %v1719, 0.0
      %1806 = vadd.xlane.f32.xlu0 %v1805
      %v1807 = vpop.xlane.xlu0 %1806
      %v1808 = vsel %vm1543, %v1721, 0.0
      %1809 = vadd.xlane.f32.xlu0 %v1808
      %v1810 = vpop.xlane.xlu0 %1809
      %v1811 = vsel %vm1543, %v1723, 0.0
      %1812 = vadd.xlane.f32.xlu0 %v1811
      %v1813 = vpop.xlane.xlu0 %1812
      %v1814 = vsel %vm1543, %v1725, 0.0
      %1815 = vadd.xlane.f32.xlu0 %v1814
      %v1816 = vpop.xlane.xlu0 %1815
      %v1817 = vsel %vm1543, %v1727, 0.0
      %1818 = vadd.xlane.f32.xlu0 %v1817
      %v1819 = vpop.xlane.xlu0 %1818
      %v1820 = vsel %vm1543, %v1729, 0.0
      %1821 = vadd.xlane.f32.xlu0 %v1820
      %v1822 = vpop.xlane.xlu0 %1821
      %v1823 = vsel %vm1543, %v1731, 0.0
      %1824 = vadd.xlane.f32.xlu0 %v1823
      %v1825 = vpop.xlane.xlu0 %1824
      %v1826 = vsel %vm1543, %v1733, 0.0
      %1827 = vadd.xlane.f32.xlu0 %v1826
      %v1828 = vpop.xlane.xlu0 %1827
      %v1829 = vsel %vm1543, %v1735, 0.0
      %1830 = vadd.xlane.f32.xlu0 %v1829
      %v1831 = vpop.xlane.xlu0 %1830
      %v1832 = vrcp.pop %v1738
      %v1833 = vrcp.pop %v1741
      %v1834 = vrcp.pop %v1744
      %v1835 = vrcp.pop %v1747
      %v1836 = vrcp.pop %v1750
      %v1837 = vrcp.pop %v1753
      %v1838 = vrcp.pop %v1756
      %v1839 = vrcp.pop %v1759
      %v1840 = vrcp.pop %v1762
      %v1841 = vrcp.pop %v1765
      %v1842 = vrcp.pop %v1768
      %v1843 = vrcp.pop %v1771
      %v1844 = vrcp.pop %v1774
      %v1845 = vrcp.pop %v1777
      %v1846 = vrcp.pop %v1780
      %v1847 = vrcp.pop %v1783
      %v1848 = vrcp.pop %v1786
      %v1849 = vrcp.pop %v1789
      %v1850 = vrcp.pop %v1792
      %v1851 = vrcp.pop %v1795
      %v1852 = vrcp.pop %v1798
      %v1853 = vrcp.pop %v1801
      %v1854 = vrcp.pop %v1804
      %v1855 = vrcp.pop %v1807
      %v1856 = vrcp.pop %v1810
      %v1857 = vrcp.pop %v1813
      %v1858 = vrcp.pop %v1816
      %v1859 = vrcp.pop %v1819
      %v1860 = vrcp.pop %v1822
      %v1861 = vrcp.pop %v1825
      %v1862 = vrcp.pop %v1828
      %v1863 = vrcp.pop %v1831
      %v1864 = vmul.f32 %v1673, %v1832
      %v1865 = vmul.f32 %v1675, %v1833
      %v1866 = vmul.f32 %v1677, %v1834
      %v1867 = vmul.f32 %v1679, %v1835
      %v1868 = vmul.f32 %v1681, %v1836
      %v1869 = vmul.f32 %v1683, %v1837
      %v1870 = vmul.f32 %v1685, %v1838
      %v1871 = vmul.f32 %v1687, %v1839
      %v1872 = vmul.f32 %v1689, %v1840
      %v1873 = vmul.f32 %v1691, %v1841
      %v1874 = vmul.f32 %v1693, %v1842
      %v1875 = vmul.f32 %v1695, %v1843
      %v1876 = vmul.f32 %v1697, %v1844
      %v1877 = vmul.f32 %v1699, %v1845
      %v1878 = vmul.f32 %v1701, %v1846
      %v1879 = vmul.f32 %v1703, %v1847
      %v1880 = vmul.f32 %v1705, %v1848
      %v1881 = vmul.f32 %v1707, %v1849
      %v1882 = vmul.f32 %v1709, %v1850
      %v1883 = vmul.f32 %v1711, %v1851
      %v1884 = vmul.f32 %v1713, %v1852
      %v1885 = vmul.f32 %v1715, %v1853
      %v1886 = vmul.f32 %v1717, %v1854
      %v1887 = vmul.f32 %v1719, %v1855
      %v1888 = vmul.f32 %v1721, %v1856
      %v1889 = vmul.f32 %v1723, %v1857
      %v1890 = vmul.f32 %v1725, %v1858
      %v1891 = vmul.f32 %v1727, %v1859
      %v1892 = vmul.f32 %v1729, %v1860
      %v1893 = vmul.f32 %v1731, %v1861
      %v1894 = vmul.f32 %v1733, %v1862
      %v1895 = vmul.f32 %v1735, %v1863
      %v1897 = vsel %vm1543, %v1864, 0
      %v1900 = vsel %vm1543, %v1865, 0
      %v1903 = vsel %vm1543, %v1866, 0
      %v1906 = vsel %vm1543, %v1867, 0
      %v1909 = vsel %vm1543, %v1868, 0
      %v1912 = vsel %vm1543, %v1869, 0
      %v1915 = vsel %vm1543, %v1870, 0
      %v1918 = vsel %vm1543, %v1871, 0
      %v1921 = vsel %vm1543, %v1872, 0
      %v1924 = vsel %vm1543, %v1873, 0
      %v1927 = vsel %vm1543, %v1874, 0
      %v1930 = vsel %vm1543, %v1875, 0
      %v1933 = vsel %vm1543, %v1876, 0
      %v1936 = vsel %vm1543, %v1877, 0
      %v1939 = vsel %vm1543, %v1878, 0
      %v1942 = vsel %vm1543, %v1879, 0
      %1944 = vmatprep.subr.mxu0 0.0
      %1945 = vmatpush1.msra.mxu0 0.0
      %1946 = vmatprep.subr.mxu0 0.0
      %1947 = vmatpush1.msra.mxu0 0.0
      %1948 = vmatprep.subr.mxu0 0.0
      %1949 = vmatpush1.msra.mxu0 0.0
      %1950 = vmatprep.subr.mxu0 0.0
      %1951 = vmatpush1.msra.mxu0 0.0
      %1952 = vmatprep.subr.mxu0 0.0
      %1953 = vmatpush1.msra.mxu0 0.0
      %1954 = vmatprep.subr.mxu0 0.0
      %1955 = vmatpush1.msra.mxu0 0.0
      %1956 = vmatprep.subr.mxu0 0.0
      %1957 = vmatpush1.msra.mxu0 0.0
      %1958 = vmatprep.subr.mxu0 0.0
      %1959 = vmatpush1.msra.mxu0 0.0
      %1960 = vmatprep.subr.mxu0 0.0
      %1961 = vmatpush1.msra.mxu0 %v1065
      %1962 = vmatprep.subr.mxu0 0.0
      %1963 = vmatpush1.msra.mxu0 %v1060
      %1964 = vmatprep.subr.mxu0 0.0
      %1965 = vmatpush1.msra.mxu0 %v1055
      %1966 = vmatprep.subr.mxu0 0.0
      %1967 = vmatpush1.msra.mxu0 %v1050
      %1968 = vmatprep.subr.mxu0 0.0
      %1969 = vmatpush1.msra.mxu0 %v1045
      %1970 = vmatprep.subr.mxu0 0.0
      %1971 = vmatpush1.msra.mxu0 %v1040
      %1972 = vmatprep.subr.mxu0 0.0
      %1973 = vmatpush1.msra.mxu0 %v1035
      %1974 = vmatprep.subr.mxu0 0.0
      %1975 = vmatpush1.msra.mxu0 %v1030
      %1976 = vmatprep.subr.mxu0 0.0
      %1977 = vmatpush2.msra.mxu0 0.0
      %1978 = vmatprep.subr.mxu0 0.0
      %1979 = vmatpush2.msra.mxu0 0.0
      %1980 = vmatprep.subr.mxu0 0.0
      %1981 = vmatpush2.msra.mxu0 0.0
      %1982 = vmatprep.subr.mxu0 0.0
      %1983 = vmatpush2.msra.mxu0 0.0
      %1984 = vmatprep.subr.mxu0 0.0
      %1985 = vmatpush2.msra.mxu0 0.0
      %1986 = vmatprep.subr.mxu0 0.0
      %1987 = vmatpush2.msra.mxu0 0.0
      %1988 = vmatprep.subr.mxu0 0.0
      %1989 = vmatpush2.msra.mxu0 0.0
      %1990 = vmatprep.subr.mxu0 0.0
      %1991 = vmatpush2.msra.mxu0 0.0
      %1992 = vmatprep.subr.mxu0 0.0
      %1993 = vmatpush2.msra.mxu0 0.0
      %1994 = vmatprep.subr.mxu0 0.0
      %1995 = vmatpush2.msra.mxu0 0.0
      %1996 = vmatprep.subr.mxu0 0.0
      %1997 = vmatpush2.msra.mxu0 0.0
      %1998 = vmatprep.subr.mxu0 0.0
      %1999 = vmatpush2.msra.mxu0 0.0
      %2000 = vmatprep.subr.mxu0 0.0
      %2001 = vmatpush2.msra.mxu0 0.0
      %2002 = vmatprep.subr.mxu0 0.0
      %2003 = vmatpush2.msra.mxu0 0.0
      %2004 = vmatprep.subr.mxu0 0.0
      %2005 = vmatpush2.msra.mxu0 0.0
      %2006 = vmatprep.subr.mxu0 0.0
      %2007 = vmatpush2.msra.mxu0 0.0
      %2008 = vmatprep.mubr.f32.mxu0 0.0
      %2009 = vmatmul.mubr.f32.gmra.mxu0 %v1897
      %v2010 = vpop.f32.mrf.mxu0
      %v2011 = vadd.f32 0.0, %v2010
      %v2012 = vpop.f32.mrf.mxu0
      %2013 = vmatprep.mubr.f32.mxu0 0.0
      %2014 = vmatmul.mubr.f32.gmra.mxu0 %v1900
      %v2015 = vpop.f32.mrf.mxu0
      %v2016 = vadd.f32 0.0, %v2015
      %v2017 = vpop.f32.mrf.mxu0
      %2018 = vmatprep.mubr.f32.mxu0 0.0
      %2019 = vmatmul.mubr.f32.gmra.mxu0 %v1903
      %v2020 = vpop.f32.mrf.mxu0
      %v2021 = vadd.f32 0.0, %v2020
      %v2022 = vpop.f32.mrf.mxu0
      %2023 = vmatprep.mubr.f32.mxu0 0.0
      %2024 = vmatmul.mubr.f32.gmra.mxu0 %v1906
      %v2025 = vpop.f32.mrf.mxu0
      %v2026 = vadd.f32 0.0, %v2025
      %v2027 = vpop.f32.mrf.mxu0
      %2028 = vmatprep.mubr.f32.mxu0 0.0
      %2029 = vmatmul.mubr.f32.gmra.mxu0 %v1909
      %v2030 = vpop.f32.mrf.mxu0
      %v2031 = vadd.f32 0.0, %v2030
      %v2032 = vpop.f32.mrf.mxu0
      %2033 = vmatprep.mubr.f32.mxu0 0.0
      %2034 = vmatmul.mubr.f32.gmra.mxu0 %v1912
      %v2035 = vpop.f32.mrf.mxu0
      %v2036 = vadd.f32 0.0, %v2035
      %v2037 = vpop.f32.mrf.mxu0
      %2038 = vmatprep.mubr.f32.mxu0 0.0
      %2039 = vmatmul.mubr.f32.gmra.mxu0 %v1915
      %v2040 = vpop.f32.mrf.mxu0
      %v2041 = vadd.f32 0.0, %v2040
      %v2042 = vpop.f32.mrf.mxu0
      %2043 = vmatprep.mubr.f32.mxu0 0.0
      %2044 = vmatmul.mubr.f32.gmra.mxu0 %v1918
      %v2045 = vpop.f32.mrf.mxu0
      %v2046 = vadd.f32 0.0, %v2045
      %v2047 = vpop.f32.mrf.mxu0
      %2048 = vmatprep.mubr.f32.mxu0 0.0
      %2049 = vmatmul.mubr.f32.gmra.mxu0 %v1921
      %v2050 = vpop.f32.mrf.mxu0
      %v2051 = vadd.f32 0.0, %v2050
      %v2052 = vpop.f32.mrf.mxu0
      %2053 = vmatprep.mubr.f32.mxu0 0.0
      %2054 = vmatmul.mubr.f32.gmra.mxu0 %v1924
      %v2055 = vpop.f32.mrf.mxu0
      %v2056 = vadd.f32 0.0, %v2055
      %v2057 = vpop.f32.mrf.mxu0
      %2058 = vmatprep.mubr.f32.mxu0 0.0
      %2059 = vmatmul.mubr.f32.gmra.mxu0 %v1927
      %v2060 = vpop.f32.mrf.mxu0
      %v2061 = vadd.f32 0.0, %v2060
      %v2062 = vpop.f32.mrf.mxu0
      %2063 = vmatprep.mubr.f32.mxu0 0.0
      %2064 = vmatmul.mubr.f32.gmra.mxu0 %v1930
      %v2065 = vpop.f32.mrf.mxu0
      %v2066 = vadd.f32 0.0, %v2065
      %v2067 = vpop.f32.mrf.mxu0
      %2068 = vmatprep.mubr.f32.mxu0 0.0
      %2069 = vmatmul.mubr.f32.gmra.mxu0 %v1933
      %v2070 = vpop.f32.mrf.mxu0
      %v2071 = vadd.f32 0.0, %v2070
      %v2072 = vpop.f32.mrf.mxu0
      %2073 = vmatprep.mubr.f32.mxu0 0.0
      %2074 = vmatmul.mubr.f32.gmra.mxu0 %v1936
      %v2075 = vpop.f32.mrf.mxu0
      %v2076 = vadd.f32 0.0, %v2075
      %v2077 = vpop.f32.mrf.mxu0
      %2078 = vmatprep.mubr.f32.mxu0 0.0
      %2079 = vmatmul.mubr.f32.gmra.mxu0 %v1939
      %v2080 = vpop.f32.mrf.mxu0
      %v2081 = vadd.f32 0.0, %v2080
      %v2082 = vpop.f32.mrf.mxu0
      %2083 = vmatprep.mubr.f32.mxu0 0.0
      %2084 = vmatmul.mubr.f32.gmra.mxu0 %v1942
      %v2085 = vpop.f32.mrf.mxu0
      %v2086 = vadd.f32 0.0, %v2085
      %v2087 = vpop.f32.mrf.mxu0
      %2088 = vdwg.mxu0
      %v2090 = vsel %vm1543, %v1880, 0
      %v2093 = vsel %vm1543, %v1881, 0
      %v2096 = vsel %vm1543, %v1882, 0
      %v2099 = vsel %vm1543, %v1883, 0
      %v2102 = vsel %vm1543, %v1884, 0
      %v2105 = vsel %vm1543, %v1885, 0
      %v2108 = vsel %vm1543, %v1886, 0
      %v2111 = vsel %vm1543, %v1887, 0
      %v2114 = vsel %vm1543, %v1888, 0
      %v2117 = vsel %vm1543, %v1889, 0
      %v2120 = vsel %vm1543, %v1890, 0
      %v2123 = vsel %vm1543, %v1891, 0
      %v2126 = vsel %vm1543, %v1892, 0
      %v2129 = vsel %vm1543, %v1893, 0
      %v2132 = vsel %vm1543, %v1894, 0
      %v2135 = vsel %vm1543, %v1895, 0
      %2137 = vmatprep.subr.mxu0 0.0
      %2138 = vmatpush1.msra.mxu0 0.0
      %2139 = vmatprep.subr.mxu0 0.0
      %2140 = vmatpush1.msra.mxu0 0.0
      %2141 = vmatprep.subr.mxu0 0.0
      %2142 = vmatpush1.msra.mxu0 0.0
      %2143 = vmatprep.subr.mxu0 0.0
      %2144 = vmatpush1.msra.mxu0 0.0
      %2145 = vmatprep.subr.mxu0 0.0
      %2146 = vmatpush1.msra.mxu0 0.0
      %2147 = vmatprep.subr.mxu0 0.0
      %2148 = vmatpush1.msra.mxu0 0.0
      %2149 = vmatprep.subr.mxu0 0.0
      %2150 = vmatpush1.msra.mxu0 0.0
      %2151 = vmatprep.subr.mxu0 0.0
      %2152 = vmatpush1.msra.mxu0 0.0
      %2153 = vmatprep.subr.mxu0 0.0
      %2154 = vmatpush1.msra.mxu0 %v1105
      %2155 = vmatprep.subr.mxu0 0.0
      %2156 = vmatpush1.msra.mxu0 %v1100
      %2157 = vmatprep.subr.mxu0 0.0
      %2158 = vmatpush1.msra.mxu0 %v1095
      %2159 = vmatprep.subr.mxu0 0.0
      %2160 = vmatpush1.msra.mxu0 %v1090
      %2161 = vmatprep.subr.mxu0 0.0
      %2162 = vmatpush1.msra.mxu0 %v1085
      %2163 = vmatprep.subr.mxu0 0.0
      %2164 = vmatpush1.msra.mxu0 %v1080
      %2165 = vmatprep.subr.mxu0 0.0
      %2166 = vmatpush1.msra.mxu0 %v1075
      %2167 = vmatprep.subr.mxu0 0.0
      %2168 = vmatpush1.msra.mxu0 %v1070
      %2169 = vmatprep.subr.mxu0 0.0
      %2170 = vmatpush2.msra.mxu0 0.0
      %2171 = vmatprep.subr.mxu0 0.0
      %2172 = vmatpush2.msra.mxu0 0.0
      %2173 = vmatprep.subr.mxu0 0.0
      %2174 = vmatpush2.msra.mxu0 0.0
      %2175 = vmatprep.subr.mxu0 0.0
      %2176 = vmatpush2.msra.mxu0 0.0
      %2177 = vmatprep.subr.mxu0 0.0
      %2178 = vmatpush2.msra.mxu0 0.0
      %2179 = vmatprep.subr.mxu0 0.0
      %2180 = vmatpush2.msra.mxu0 0.0
      %2181 = vmatprep.subr.mxu0 0.0
      %2182 = vmatpush2.msra.mxu0 0.0
      %2183 = vmatprep.subr.mxu0 0.0
      %2184 = vmatpush2.msra.mxu0 0.0
      %2185 = vmatprep.subr.mxu0 0.0
      %2186 = vmatpush2.msra.mxu0 0.0
      %2187 = vmatprep.subr.mxu0 0.0
      %2188 = vmatpush2.msra.mxu0 0.0
      %2189 = vmatprep.subr.mxu0 0.0
      %2190 = vmatpush2.msra.mxu0 0.0
      %2191 = vmatprep.subr.mxu0 0.0
      %2192 = vmatpush2.msra.mxu0 0.0
      %2193 = vmatprep.subr.mxu0 0.0
      %2194 = vmatpush2.msra.mxu0 0.0
      %2195 = vmatprep.subr.mxu0 0.0
      %2196 = vmatpush2.msra.mxu0 0.0
      %2197 = vmatprep.subr.mxu0 0.0
      %2198 = vmatpush2.msra.mxu0 0.0
      %2199 = vmatprep.subr.mxu0 0.0
      %2200 = vmatpush2.msra.mxu0 0.0
      %2201 = vmatprep.mubr.f32.mxu0 0.0
      %2202 = vmatmul.mubr.f32.gmra.mxu0 %v2090
      %v2203 = vpop.f32.mrf.mxu0
      %v2204 = vadd.f32 0.0, %v2203
      %v2205 = vpop.f32.mrf.mxu0
      %2206 = vmatprep.mubr.f32.mxu0 0.0
      %2207 = vmatmul.mubr.f32.gmra.mxu0 %v2093
      %v2208 = vpop.f32.mrf.mxu0
      %v2209 = vadd.f32 0.0, %v2208
      %v2210 = vpop.f32.mrf.mxu0
      %2211 = vmatprep.mubr.f32.mxu0 0.0
      %2212 = vmatmul.mubr.f32.gmra.mxu0 %v2096
      %v2213 = vpop.f32.mrf.mxu0
      %v2214 = vadd.f32 0.0, %v2213
      %v2215 = vpop.f32.mrf.mxu0
      %2216 = vmatprep.mubr.f32.mxu0 0.0
      %2217 = vmatmul.mubr.f32.gmra.mxu0 %v2099
      %v2218 = vpop.f32.mrf.mxu0
      %v2219 = vadd.f32 0.0, %v2218
      %v2220 = vpop.f32.mrf.mxu0
      %2221 = vmatprep.mubr.f32.mxu0 0.0
      %2222 = vmatmul.mubr.f32.gmra.mxu0 %v2102
      %v2223 = vpop.f32.mrf.mxu0
      %v2224 = vadd.f32 0.0, %v2223
      %v2225 = vpop.f32.mrf.mxu0
      %2226 = vmatprep.mubr.f32.mxu0 0.0
      %2227 = vmatmul.mubr.f32.gmra.mxu0 %v2105
      %v2228 = vpop.f32.mrf.mxu0
      %v2229 = vadd.f32 0.0, %v2228
      %v2230 = vpop.f32.mrf.mxu0
      %2231 = vmatprep.mubr.f32.mxu0 0.0
      %2232 = vmatmul.mubr.f32.gmra.mxu0 %v2108
      %v2233 = vpop.f32.mrf.mxu0
      %v2234 = vadd.f32 0.0, %v2233
      %v2235 = vpop.f32.mrf.mxu0
      %2236 = vmatprep.mubr.f32.mxu0 0.0
      %2237 = vmatmul.mubr.f32.gmra.mxu0 %v2111
      %v2238 = vpop.f32.mrf.mxu0
      %v2239 = vadd.f32 0.0, %v2238
      %v2240 = vpop.f32.mrf.mxu0
      %2241 = vmatprep.mubr.f32.mxu0 0.0
      %2242 = vmatmul.mubr.f32.gmra.mxu0 %v2114
      %v2243 = vpop.f32.mrf.mxu0
      %v2244 = vadd.f32 0.0, %v2243
      %v2245 = vpop.f32.mrf.mxu0
      %2246 = vmatprep.mubr.f32.mxu0 0.0
      %2247 = vmatmul.mubr.f32.gmra.mxu0 %v2117
      %v2248 = vpop.f32.mrf.mxu0
      %v2249 = vadd.f32 0.0, %v2248
      %v2250 = vpop.f32.mrf.mxu0
      %2251 = vmatprep.mubr.f32.mxu0 0.0
      %2252 = vmatmul.mubr.f32.gmra.mxu0 %v2120
      %v2253 = vpop.f32.mrf.mxu0
      %v2254 = vadd.f32 0.0, %v2253
      %v2255 = vpop.f32.mrf.mxu0
      %2256 = vmatprep.mubr.f32.mxu0 0.0
      %2257 = vmatmul.mubr.f32.gmra.mxu0 %v2123
      %v2258 = vpop.f32.mrf.mxu0
      %v2259 = vadd.f32 0.0, %v2258
      %v2260 = vpop.f32.mrf.mxu0
      %2261 = vmatprep.mubr.f32.mxu0 0.0
      %2262 = vmatmul.mubr.f32.gmra.mxu0 %v2126
      %v2263 = vpop.f32.mrf.mxu0
      %v2264 = vadd.f32 0.0, %v2263
      %v2265 = vpop.f32.mrf.mxu0
      %2266 = vmatprep.mubr.f32.mxu0 0.0
      %2267 = vmatmul.mubr.f32.gmra.mxu0 %v2129
      %v2268 = vpop.f32.mrf.mxu0
      %v2269 = vadd.f32 0.0, %v2268
      %v2270 = vpop.f32.mrf.mxu0
      %2271 = vmatprep.mubr.f32.mxu0 0.0
      %2272 = vmatmul.mubr.f32.gmra.mxu0 %v2132
      %v2273 = vpop.f32.mrf.mxu0
      %v2274 = vadd.f32 0.0, %v2273
      %v2275 = vpop.f32.mrf.mxu0
      %2276 = vmatprep.mubr.f32.mxu0 0.0
      %2277 = vmatmul.mubr.f32.gmra.mxu0 %v2135
      %v2278 = vpop.f32.mrf.mxu0
      %v2279 = vadd.f32 0.0, %v2278
      %v2280 = vpop.f32.mrf.mxu0
      %2281 = vdwg.mxu0
      %v2282 = vld [vmem:[%s7] sm:$0xf]
      %v2283 = vld [vmem:[%s8] sm:$0xf]
      %2285 = vset.pattern.permute.xlu0 0
      %2286 = vperm.xlu0 %2285, %v2283
      %v2287 = vpop.permute.xlu0 %2286
      %v2290 = vsel %vm1108, %v2282, 0
      %v2293 = vsel %vm1108, %v2011, 0
      %v2296 = vsel %vm1108, %v2016, 0
      %v2299 = vsel %vm1108, %v2021, 0
      %v2302 = vsel %vm1108, %v2026, 0
      %v2305 = vsel %vm1108, %v2031, 0
      %v2308 = vsel %vm1108, %v2036, 0
      %v2311 = vsel %vm1108, %v2041, 0
      %v2314 = vsel %vm1108, %v2046, 0
      %v2317 = vsel %vm1108, %v2051, 0
      %v2320 = vsel %vm1108, %v2056, 0
      %v2323 = vsel %vm1108, %v2061, 0
      %v2326 = vsel %vm1108, %v2066, 0
      %v2329 = vsel %vm1108, %v2071, 0
      %v2332 = vsel %vm1108, %v2076, 0
      %v2335 = vsel %vm1108, %v2081, 0
      %v2338 = vsel %vm1108, %v2086, 0
      %v2341 = vsel %vm1108, %v2204, 0
      %v2344 = vsel %vm1108, %v2209, 0
      %v2347 = vsel %vm1108, %v2214, 0
      %v2350 = vsel %vm1108, %v2219, 0
      %v2353 = vsel %vm1108, %v2224, 0
      %v2356 = vsel %vm1108, %v2229, 0
      %v2359 = vsel %vm1108, %v2234, 0
      %v2362 = vsel %vm1108, %v2239, 0
      %v2365 = vsel %vm1108, %v2244, 0
      %v2368 = vsel %vm1108, %v2249, 0
      %v2371 = vsel %vm1108, %v2254, 0
      %v2374 = vsel %vm1108, %v2259, 0
      %v2377 = vsel %vm1108, %v2264, 0
      %v2380 = vsel %vm1108, %v2269, 0
      %v2383 = vsel %vm1108, %v2274, 0
      %v2386 = vsel %vm1108, %v2279, 0
      %2388 = vmatprep.subr.mxu0 0.0
      %2389 = vmatpush1.xpose.msra.mxu0 %v2338
      %2390 = vmatprep.subr.mxu0 0.0
      %2391 = vmatpush1.xpose.msra.mxu0 %v2335
      %2392 = vmatprep.subr.mxu0 0.0
      %2393 = vmatpush1.xpose.msra.mxu0 %v2332
      %2394 = vmatprep.subr.mxu0 0.0
      %2395 = vmatpush1.xpose.msra.mxu0 %v2329
      %2396 = vmatprep.subr.mxu0 0.0
      %2397 = vmatpush1.xpose.msra.mxu0 %v2326
      %2398 = vmatprep.subr.mxu0 0.0
      %2399 = vmatpush1.xpose.msra.mxu0 %v2323
      %2400 = vmatprep.subr.mxu0 0.0
      %2401 = vmatpush1.xpose.msra.mxu0 %v2320
      %2402 = vmatprep.subr.mxu0 0.0
      %2403 = vmatpush1.xpose.msra.mxu0 %v2317
      %2404 = vmatprep.subr.mxu0 0.0
      %2405 = vmatpush1.xpose.msra.mxu0 %v2314
      %2406 = vmatprep.subr.mxu0 0.0
      %2407 = vmatpush1.xpose.msra.mxu0 %v2311
      %2408 = vmatprep.subr.mxu0 0.0
      %2409 = vmatpush1.xpose.msra.mxu0 %v2308
      %2410 = vmatprep.subr.mxu0 0.0
      %2411 = vmatpush1.xpose.msra.mxu0 %v2305
      %2412 = vmatprep.subr.mxu0 0.0
      %2413 = vmatpush1.xpose.msra.mxu0 %v2302
      %2414 = vmatprep.subr.mxu0 0.0
      %2415 = vmatpush1.xpose.msra.mxu0 %v2299
      %2416 = vmatprep.subr.mxu0 0.0
      %2417 = vmatpush1.xpose.msra.mxu0 %v2296
      %2418 = vmatprep.subr.mxu0 0.0
      %2419 = vmatpush1.xpose.msra.mxu0 %v2293
      %2420 = vmatprep.subr.mxu0 0.0
      %2421 = vmatpush2.xpose.msra.mxu0 %v2386
      %2422 = vmatprep.subr.mxu0 0.0
      %2423 = vmatpush2.xpose.msra.mxu0 %v2383
      %2424 = vmatprep.subr.mxu0 0.0
      %2425 = vmatpush2.xpose.msra.mxu0 %v2380
      %2426 = vmatprep.subr.mxu0 0.0
      %2427 = vmatpush2.xpose.msra.mxu0 %v2377
      %2428 = vmatprep.subr.mxu0 0.0
      %2429 = vmatpush2.xpose.msra.mxu0 %v2374
      %2430 = vmatprep.subr.mxu0 0.0
      %2431 = vmatpush2.xpose.msra.mxu0 %v2371
      %2432 = vmatprep.subr.mxu0 0.0
      %2433 = vmatpush2.xpose.msra.mxu0 %v2368
      %2434 = vmatprep.subr.mxu0 0.0
      %2435 = vmatpush2.xpose.msra.mxu0 %v2365
      %2436 = vmatprep.subr.mxu0 0.0
      %2437 = vmatpush2.xpose.msra.mxu0 %v2362
      %2438 = vmatprep.subr.mxu0 0.0
      %2439 = vmatpush2.xpose.msra.mxu0 %v2359
      %2440 = vmatprep.subr.mxu0 0.0
      %2441 = vmatpush2.xpose.msra.mxu0 %v2356
      %2442 = vmatprep.subr.mxu0 0.0
      %2443 = vmatpush2.xpose.msra.mxu0 %v2353
      %2444 = vmatprep.subr.mxu0 0.0
      %2445 = vmatpush2.xpose.msra.mxu0 %v2350
      %2446 = vmatprep.subr.mxu0 0.0
      %2447 = vmatpush2.xpose.msra.mxu0 %v2347
      %2448 = vmatprep.subr.mxu0 0.0
      %2449 = vmatpush2.xpose.msra.mxu0 %v2344
      %2450 = vmatprep.subr.mxu0 0.0
      %2451 = vmatpush2.xpose.msra.mxu0 %v2341
      %2452 = vmatprep.mubr.f32.mxu0 0.0
      %2453 = vmatmul.mubr.f32.gmra.mxu0 %v2290
      %v2454 = vpop.f32.mrf.mxu0
      %v2455 = vadd.f32 %v2287, %v2454
      %v2456 = vpop.f32.mrf.mxu0
      %v2457 = vadd.f32 %v2287, %v2456
      %2458 = vdwg.mxu0
      %v2459 = vld [vmem:[%s367] sm:$0xff]
      %v2461 = vcombine.high %v2459, %v2459
      %v2463 = vadd.f32 %v2455, %v2459
      %v2464 = vadd.f32 %v2457, %v2461
      %v2467 = vcombine.low %v2463, %v2464
      %2469 = vst [vmem:[%s372] sm:$0xff] %v2467
      %p2470 = scmp.lt.s32.totalorder %s20, 1
      %s2471 = scalar_select %p2470, %s20, 1
      %s2472 = smul.addr %s2471, 2
      %s2473 = smul.addr %s2472, 4
      %s2474 = scalar_lea.vmem %s9, %s2473
      // Predicated region
      $region57: #{region_nonlocal_block.1} parent=55 // pred_check
        %p2475 = pneg %p242
      $region58: #{region_nonlocal_block.1} parent=55 // pred_check_branch
        %2477 = sbr.rel (%p2475) target = $region60
      $region59: #{region_nonlocal_block.1} parent=55 // pred_region
        _
      $region60: #{region_nonlocal_block.1} parent=55 // pred_fallthru
        _
    $region56: #{region_nonlocal_block.1} parent=5 // pred_fallthru
      _
    %p2478 = scmp.le.s32.totalorder 2, %s15
    // Predicated region
    $region61: #{region_nonlocal_block.1} parent=5 // pred_check
      %p2479 = pneg %p2478
    $region62: #{region_nonlocal_block.1} parent=5 // pred_check_branch
      %2481 = sbr.rel (%p2479) target = $region64
    $region63: #{region_nonlocal_block.1} parent=5 // pred_region
      %s2482 = ssub.s32 %s15, 2
      // Predicated region
      $region65: #{region_nonlocal_block.1} parent=63 // pred_check
        %p2483 = pneg %p248
      $region66: #{region_nonlocal_block.1} parent=63 // pred_check_branch
        %2485 = sbr.rel (%p2483) target = $region68
      $region67: #{region_nonlocal_block.1} parent=63 // pred_region
        %p2486 = scmp.lt.s32.totalorder %s21, 1
        %s2487 = scalar_select %p2486, %s21, 1
        %s2488 = smul.addr %s2487, 2
        %s2489 = smul.addr %s2488, 4
        %s2490 = scalar_lea.vmem %s9, %s2489
      $region68: #{region_nonlocal_block.1} parent=63 // pred_fallthru
        _
    $region64: #{region_nonlocal_block.1} parent=5 // pred_fallthru
      _
  $region6: #{region_nonlocal_block.1} parent=0 // loop_footer
    %s19 = sadd.s32 1, %s15
  $region7: #{region_nonlocal_block.1} parent=0 // loop_footer_branch
    %14 = sbr.rel target = $region3
  $region8: #{region_nonlocal_block.1} parent=0 // loop_exit
    _

</llo_original>
